<compile_context>
chip_gen: v6e
topology: v6e:2x2x1
jax: 0.10.0
libtpu: 0.0.40
codegen_flags: <defaults>
</compile_context>

<pallas_src>
import math

import jax
import jax.numpy as jnp
import numpy as np
from jax.experimental import pallas as pl
from jax.experimental.pallas import tpu as pltpu


def _round_up(x: int, m: int) -> int:
    return (x + m - 1) // m * m


# --------------------------------------------------------------------------
# Kernel: one grid step handles Bt batch elements end-to-end.
# --------------------------------------------------------------------------
def _attention_kernel(x_ref, wqkv_ref, wo_ref, bqkv_ref, bo_ref, o_ref):
    Bt, S, Fp = x_ref.shape
    Mp = (wqkv_ref.shape[1] - Fp) // 2

    # ---- fused Q|K|V projection: one wide bf16 matmul, f32 accumulation ----
    x2 = x_ref[...].reshape(Bt * S, Fp)                         # bf16
    qkv = jnp.dot(x2, wqkv_ref[...],
                  preferred_element_type=jnp.float32) + bqkv_ref[...]
    q = qkv[:, :Mp].reshape(Bt, S, Mp)          # already scaled by 1/sqrt(M)
    k = qkv[:, Mp:2 * Mp].reshape(Bt, S, Mp)
    v = qkv[:, 2 * Mp:].reshape(Bt, S, Fp).astype(jnp.bfloat16)

    # ---- scores + softmax over the QUERY axis (nn.Softmax(dim=1)) ----
    scores = jnp.einsum('bqm,bkm->bqk', q, k,
                        preferred_element_type=jnp.float32)     # (Bt, Sq, Sk)
    scores = scores - jnp.max(scores, axis=1, keepdims=True)    # query axis
    e = jnp.exp(scores)
    p = e * pl.reciprocal(jnp.sum(e, axis=1, keepdims=True), approx=True)

    # ---- attention-weighted values + output projection ----
    atten = jnp.einsum('bqk,bkf->bqf', p.astype(jnp.bfloat16), v,
                       preferred_element_type=jnp.float32)      # (Bt, S, Fp)
    out = jnp.dot(atten.reshape(Bt * S, Fp).astype(jnp.bfloat16), wo_ref[...],
                  preferred_element_type=jnp.float32) + bo_ref[...]
    o_ref[...] = out.reshape(Bt, S, Fp).astype(o_ref.dtype)


# --------------------------------------------------------------------------
# VMEM budgeting / batch-tile selection.
# --------------------------------------------------------------------------
def _vmem_bytes(bt, S, Fp, Mp):
    qkv_w = 2 * Mp + Fp
    b = 0
    b += 2 * bt * S * Fp * 2                 # x block (bf16), double-buffered
    b += 2 * bt * S * Fp * 4                 # out block (f32), double-buffered
    b += Fp * qkv_w * 2 + Fp * Fp * 2        # fused weights (bf16), 1 buffer
    b += 8 * (qkv_w + Fp) * 4                # biases (f32, sublane padded)
    # in-kernel intermediates (qkv, scores/exp/p, atten, bf16 copies), 2x slop
    b += 2 * (bt * S * qkv_w * 4 + 3 * bt * S * S * 4 + 2 * bt * S * Fp * 4)
    return b


def _choose_batch_tile(B, S, Fp, Mp, budget):
    divisors = [d for d in range(1, B + 1) if B % d == 0]
    fitting = [d for d in divisors if _vmem_bytes(d, S, Fp, Mp) <= budget]
    bt = max(fitting) if fitting else 1
    # Keep at least 2 grid steps when B allows it (v7x has 2 TensorCores).
    while bt > 1 and B // bt < 2:
        bt = max(d for d in divisors if d < bt)
    return bt


# --------------------------------------------------------------------------
# Wrapper: pad to lane-dense shapes, fuse weights, launch the kernel.
# --------------------------------------------------------------------------
def attention_forward(x, params, *, vmem_budget_bytes=40 * 1024 * 1024):
    """x: (B, S, F) float32.  params: dict of torch-layout weights/biases."""
    B, S, F = x.shape
    M = F // 4
    Fp = _round_up(F, 128)
    Mp = _round_up(M, 128)
    scale = 1.0 / math.sqrt(float(M))

    def pad_w(w, rows, cols):   # torch layout (out, in) -> zero-padded
        w = jnp.asarray(w, jnp.float32)
        return jnp.pad(w, ((0, rows - w.shape[0]), (0, cols - w.shape[1])))

    def pad_b(b, n):
        b = jnp.asarray(b, jnp.float32)
        return jnp.pad(b, (0, n - b.shape[0]))

    # Fused QKV weight (in, out) layout, bf16; 1/sqrt(M) folded into Q slice.
    wq = pad_w(params['wq'], Mp, Fp) * scale
    wk = pad_w(params['wk'], Mp, Fp)
    wv = pad_w(params['wv'], Fp, Fp)
    wo = pad_w(params['wo'], Fp, Fp)
    w_qkv = jnp.concatenate([wq.T, wk.T, wv.T], axis=1).astype(jnp.bfloat16)
    w_o = wo.T.astype(jnp.bfloat16)
    b_qkv = jnp.concatenate([pad_b(params['bq'], Mp) * scale,
                             pad_b(params['bk'], Mp),
                             pad_b(params['bv'], Fp)]).reshape(1, 2 * Mp + Fp)
    b_o = pad_b(params['bo'], Fp).reshape(1, Fp)

    x_p = jnp.pad(x, ((0, 0), (0, 0), (0, Fp - F))).astype(jnp.bfloat16)

    Bt = _choose_batch_tile(B, S, Fp, Mp, vmem_budget_bytes)
    grid = (B // Bt,)
    vmem_limit = int(min(max(2 * _vmem_bytes(Bt, S, Fp, Mp), 4 << 20)
                         + (2 << 20), 64 << 20))

    def call(single_buffer_weights):
        if single_buffer_weights:
            const_spec = lambda shape: pl.BlockSpec(
                shape, lambda b: tuple(0 for _ in shape),
                pipeline_mode=pl.Buffered(1))
        else:
            const_spec = lambda shape: pl.BlockSpec(
                shape, lambda b: tuple(0 for _ in shape))
        return pl.pallas_call(
            _attention_kernel,
            out_shape=jax.ShapeDtypeStruct((B, S, Fp), x.dtype),
            grid_spec=pltpu.PrefetchScalarGridSpec(
                num_scalar_prefetch=0,
                grid=grid,
                in_specs=[
                    pl.BlockSpec((Bt, S, Fp), lambda b: (b, 0, 0)),  # x
                    const_spec((Fp, 2 * Mp + Fp)),                   # W_qkv
                    const_spec((Fp, Fp)),                            # W_o
                    const_spec((1, 2 * Mp + Fp)),                    # b_qkv
                    const_spec((1, Fp)),                             # b_o
                ],
                out_specs=pl.BlockSpec((Bt, S, Fp), lambda b: (b, 0, 0)),
            ),
            compiler_params=pltpu.CompilerParams(
                dimension_semantics=("parallel",),
                vmem_limit_bytes=vmem_limit),
        )(x_p, w_qkv, w_o, b_qkv, b_o)

    try:
        out = call(single_buffer_weights=True)
    except Exception:
        # Fallback for JAX builds without BlockSpec(pipeline_mode=...);
        # identical math, just default double-buffered constant operands.
        out = call(single_buffer_weights=False)

    return out[:, :, :F]


# --------------------------------------------------------------------------
# Deterministic init mimicking kaiming_normal_ (fan_in) + bias=0.1.
# --------------------------------------------------------------------------
def init_params(key, feature_dim, bias=True):
    M = feature_dim // 4
    ks = jax.random.split(key, 4)

    def kaiming(k, out_f, in_f):
        std = math.sqrt(2.0 / in_f)
        return jax.random.normal(k, (out_f, in_f), jnp.float32) * std

    bias_val = 0.1 if bias else 0.0
    return {
        'wq': kaiming(ks[0], M, feature_dim),
        'wk': kaiming(ks[1], M, feature_dim),
        'wv': kaiming(ks[2], feature_dim, feature_dim),
        'wo': kaiming(ks[3], feature_dim, feature_dim),
        'bq': jnp.full((M,), bias_val, jnp.float32),
        'bk': jnp.full((M,), bias_val, jnp.float32),
        'bv': jnp.full((feature_dim,), bias_val, jnp.float32),
        'bo': jnp.full((feature_dim,), bias_val, jnp.float32),
    }


def attention_reference(x, params):
    """Pure-JAX (f32) replica of the PyTorch forward for correctness."""
    wq, wk, wv, wo = params['wq'], params['wk'], params['wv'], params['wo']
    bq, bk, bv, bo = params['bq'], params['bk'], params['bv'], params['bo']
    Q = jnp.einsum('bsf,mf->bsm', x, wq) + bq
    K = jnp.einsum('bsf,mf->bsm', x, wk) + bk
    V = jnp.einsum('bsf,gf->bsg', x, wv) + bv
    M = Q.shape[-1]
    scores = jnp.einsum('bsm,btm->bst', Q, K) / math.sqrt(float(M))
    allign = jax.nn.softmax(scores, axis=1)           # dim=1, as in the module
    atten = jnp.einsum('bst,btf->bsf', allign, V)
    return jnp.einsum('bsf,gf->bsg', atten, wo) + bo


if __name__ == "__main__":
    B, S, F = 2, 8, 32          # feature_dim=32 -> model_dim=8
    key = jax.random.PRNGKey(0)
    kx, kp = jax.random.split(key)

    x = jax.random.normal(kx, (B, S, F), jnp.float32)
    params = init_params(kp, F, bias=True)

    out = attention_forward(x, params)
    out = jax.block_until_ready(out)

    ref = attention_reference(x, params)
    # bf16 matmul operands + approx reciprocal -> loosened tolerance.
    np.testing.assert_allclose(np.asarray(out), np.asarray(ref),
                               rtol=5e-2, atol=5e-2)
    print("KERNEL_OK")
</pallas_src>

<mosaic_0001>
module attributes {stable_mosaic.version = 11 : i64} {
  func.func @_attention_kernel(%arg0: i32, %arg1: memref<1x8x128xbf16, #tpu.memory_space<vmem>>, %arg2: memref<128x384xbf16, #tpu.memory_space<vmem>>, %arg3: memref<128x128xbf16, #tpu.memory_space<vmem>>, %arg4: memref<1x384xf32, #tpu.memory_space<vmem>>, %arg5: memref<1x128xf32, #tpu.memory_space<vmem>>, %arg6: memref<1x8x128xf32, #tpu.memory_space<vmem>>) attributes {dimension_semantics = [#tpu.dimension_semantics<parallel>], iteration_bounds = array<i64: 2>, scalar_prefetch = 0 : i64, scratch_operands = 0 : i64, tpu.core_type = #tpu.core_type<tc>, window_params = [{transform_indices = @transform_0, window_bounds = array<i64: 1, 8, 128>}, {pipeline_mode = #tpu.pipeline_mode<synchronous>, transform_indices = @transform_1, window_bounds = array<i64: 128, 384>}, {pipeline_mode = #tpu.pipeline_mode<synchronous>, transform_indices = @transform_2, window_bounds = array<i64: 128, 128>}, {pipeline_mode = #tpu.pipeline_mode<synchronous>, transform_indices = @transform_3, window_bounds = array<i64: 1, 384>}, {pipeline_mode = #tpu.pipeline_mode<synchronous>, transform_indices = @transform_4, window_bounds = array<i64: 1, 128>}, {transform_indices = @transform_5, window_bounds = array<i64: 1, 8, 128>}]} {
    %c0 = arith.constant 0 : index
    %c0_0 = arith.constant 0 : index
    %c0_1 = arith.constant 0 : index
    %0 = vector.load %arg1[%c0, %c0_0, %c0_1] : memref<1x8x128xbf16, #tpu.memory_space<vmem>>, vector<1x8x128xbf16>
    %1 = vector.shape_cast %0 : vector<1x8x128xbf16> to vector<8x128xbf16>
    %c0_2 = arith.constant 0 : index
    %c0_3 = arith.constant 0 : index
    %2 = vector.load %arg2[%c0_2, %c0_3] : memref<128x384xbf16, #tpu.memory_space<vmem>>, vector<128x384xbf16>
    %cst = arith.constant dense<0.000000e+00> : vector<8x384xf32>
    %3 = tpu.matmul %1, %2, %cst {dimension_numbers = #tpu.dot_dimension_numbers<[1], [0], [0], [1], [0, 0, 1, 1], [], []>} : vector<8x128xbf16>, vector<128x384xbf16>, vector<8x384xf32> -> vector<8x384xf32>
    %c0_4 = arith.constant 0 : index
    %c0_5 = arith.constant 0 : index
    %4 = vector.load %arg4[%c0_4, %c0_5] : memref<1x384xf32, #tpu.memory_space<vmem>>, vector<1x384xf32>
    %5 = vector.broadcast %4 : vector<1x384xf32> to vector<8x384xf32>
    %6 = arith.addf %3, %5 : vector<8x384xf32>
    %7 = vector.extract_strided_slice %6 {offsets = [0, 0], sizes = [8, 128], strides = [1, 1]} : vector<8x384xf32> to vector<8x128xf32>
    %8 = vector.shape_cast %7 : vector<8x128xf32> to vector<1x8x128xf32>
    %9 = vector.extract_strided_slice %6 {offsets = [0, 128], sizes = [8, 128], strides = [1, 1]} : vector<8x384xf32> to vector<8x128xf32>
    %10 = vector.shape_cast %9 : vector<8x128xf32> to vector<1x8x128xf32>
    %11 = vector.extract_strided_slice %6 {offsets = [0, 256], sizes = [8, 128], strides = [1, 1]} : vector<8x384xf32> to vector<8x128xf32>
    %12 = vector.shape_cast %11 : vector<8x128xf32> to vector<1x8x128xf32>
    %13 = arith.truncf %12 : vector<1x8x128xf32> to vector<1x8x128xbf16>
    "tpu.trace_start"() <{level = 10 : i32, message = "bqm,bkm->bqk"}> : () -> ()
    %cst_6 = arith.constant dense<0.000000e+00> : vector<1x8x8xf32>
    %14 = tpu.matmul %8, %10, %cst_6 {dimension_numbers = #tpu.dot_dimension_numbers<[2], [2], [1], [1], [0, 0, 0, 1, 1, 1], [0], [0]>} : vector<1x8x128xf32>, vector<1x8x128xf32>, vector<1x8x8xf32> -> vector<1x8x8xf32>
    "tpu.trace_stop"() : () -> ()
    %cst_7 = arith.constant dense<0xFF800000> : vector<1x8xf32>
    %15 = vector.multi_reduction <maximumf>, %14, %cst_7 [1] : vector<1x8x8xf32> to vector<1x8xf32>
    %16 = vector.shape_cast %15 : vector<1x8xf32> to vector<1x1x8xf32>
    %17 = vector.broadcast %16 : vector<1x1x8xf32> to vector<1x8x8xf32>
    %18 = arith.subf %14, %17 : vector<1x8x8xf32>
    %19 = math.exp %18 : vector<1x8x8xf32>
    %cst_8 = arith.constant dense<0.000000e+00> : vector<1x8xf32>
    %20 = vector.multi_reduction <add>, %19, %cst_8 [1] : vector<1x8x8xf32> to vector<1x8xf32>
    %21 = vector.shape_cast %20 : vector<1x8xf32> to vector<1x1x8xf32>
    %22 = tpu.reciprocal %21 {approx = true} : vector<1x1x8xf32> -> vector<1x1x8xf32>
    %23 = vector.broadcast %22 : vector<1x1x8xf32> to vector<1x8x8xf32>
    %24 = arith.mulf %19, %23 : vector<1x8x8xf32>
    %25 = arith.truncf %24 : vector<1x8x8xf32> to vector<1x8x8xbf16>
    "tpu.trace_start"() <{level = 10 : i32, message = "bqk,bkf->bqf"}> : () -> ()
    %cst_9 = arith.constant dense<0.000000e+00> : vector<1x8x128xf32>
    %26 = tpu.matmul %25, %13, %cst_9 {dimension_numbers = #tpu.dot_dimension_numbers<[2], [1], [1], [2], [0, 0, 0, 1, 1, 2], [0], [0]>} : vector<1x8x8xbf16>, vector<1x8x128xbf16>, vector<1x8x128xf32> -> vector<1x8x128xf32>
    "tpu.trace_stop"() : () -> ()
    %27 = vector.shape_cast %26 : vector<1x8x128xf32> to vector<8x128xf32>
    %28 = arith.truncf %27 : vector<8x128xf32> to vector<8x128xbf16>
    %c0_10 = arith.constant 0 : index
    %c0_11 = arith.constant 0 : index
    %29 = vector.load %arg3[%c0_10, %c0_11] : memref<128x128xbf16, #tpu.memory_space<vmem>>, vector<128x128xbf16>
    %cst_12 = arith.constant dense<0.000000e+00> : vector<8x128xf32>
    %30 = tpu.matmul %28, %29, %cst_12 {dimension_numbers = #tpu.dot_dimension_numbers<[1], [0], [0], [1], [0, 0, 1, 1], [], []>} : vector<8x128xbf16>, vector<128x128xbf16>, vector<8x128xf32> -> vector<8x128xf32>
    %c0_13 = arith.constant 0 : index
    %c0_14 = arith.constant 0 : index
    %31 = vector.load %arg5[%c0_13, %c0_14] : memref<1x128xf32, #tpu.memory_space<vmem>>, vector<1x128xf32>
    %32 = vector.broadcast %31 : vector<1x128xf32> to vector<8x128xf32>
    %33 = arith.addf %30, %32 : vector<8x128xf32>
    %34 = vector.shape_cast %33 : vector<8x128xf32> to vector<1x8x128xf32>
    %c0_15 = arith.constant 0 : index
    %c0_16 = arith.constant 0 : index
    %c0_17 = arith.constant 0 : index
    %35 = vector.load %arg6[%c0_15, %c0_16, %c0_17] : memref<1x8x128xf32, #tpu.memory_space<vmem>>, vector<1x8x128xf32>
    tpu.vector_store %arg6[%c0_15, %c0_16, %c0_17], %34 {strides = array<i32>} : memref<1x8x128xf32, #tpu.memory_space<vmem>>, vector<1x8x128xf32>,
    return
  }
  func.func @transform_0(%arg0: i32) -> (i32, i32, i32) {
    %c0_i32 = arith.constant 0 : i32
    %c0_i32_0 = arith.constant 0 : i32
    %c0_i32_1 = arith.constant 0 : i32
    return %arg0, %c0_i32, %c0_i32_0 : i32, i32, i32
  }
  func.func @transform_1(%arg0: i32) -> (i32, i32) {
    %c0_i32 = arith.constant 0 : i32
    %c0_i32_0 = arith.constant 0 : i32
    %c0_i32_1 = arith.constant 0 : i32
    return %c0_i32, %c0_i32_0 : i32, i32
  }
  func.func @transform_2(%arg0: i32) -> (i32, i32) {
    %c0_i32 = arith.constant 0 : i32
    %c0_i32_0 = arith.constant 0 : i32
    %c0_i32_1 = arith.constant 0 : i32
    return %c0_i32, %c0_i32_0 : i32, i32
  }
  func.func @transform_3(%arg0: i32) -> (i32, i32) {
    %c0_i32 = arith.constant 0 : i32
    %c0_i32_0 = arith.constant 0 : i32
    %c0_i32_1 = arith.constant 0 : i32
    return %c0_i32, %c0_i32_0 : i32, i32
  }
  func.func @transform_4(%arg0: i32) -> (i32, i32) {
    %c0_i32 = arith.constant 0 : i32
    %c0_i32_0 = arith.constant 0 : i32
    %c0_i32_1 = arith.constant 0 : i32
    return %c0_i32, %c0_i32_0 : i32, i32
  }
  func.func @transform_5(%arg0: i32) -> (i32, i32, i32) {
    %c0_i32 = arith.constant 0 : i32
    %c0_i32_0 = arith.constant 0 : i32
    %c0_i32_1 = arith.constant 0 : i32
    return %arg0, %c0_i32, %c0_i32_0 : i32, i32, i32
  }
}

module attributes {stable_mosaic.version = 11 : i64} {
  func.func @_attention_kernel(%arg0: i32, %arg1: memref<1x8x128xbf16, #tpu.memory_space<vmem>>, %arg2: memref<128x384xbf16, #tpu.memory_space<vmem>>, %arg3: memref<128x128xbf16, #tpu.memory_space<vmem>>, %arg4: memref<1x384xf32, #tpu.memory_space<vmem>>, %arg5: memref<1x128xf32, #tpu.memory_space<vmem>>, %arg6: memref<1x8x128xf32, #tpu.memory_space<vmem>>) attributes {dimension_semantics = [#tpu.dimension_semantics<parallel>], iteration_bounds = array<i64: 2>, scalar_prefetch = 0 : i64, scratch_operands = 0 : i64, tpu.core_type = #tpu.core_type<tc>, window_params = [{transform_indices = @transform_0, window_bounds = array<i64: 1, 8, 128>}, {pipeline_mode = #tpu.pipeline_mode<synchronous>, transform_indices = @transform_1, window_bounds = array<i64: 128, 384>}, {pipeline_mode = #tpu.pipeline_mode<synchronous>, transform_indices = @transform_2, window_bounds = array<i64: 128, 128>}, {pipeline_mode = #tpu.pipeline_mode<synchronous>, transform_indices = @transform_3, window_bounds = array<i64: 1, 384>}, {pipeline_mode = #tpu.pipeline_mode<synchronous>, transform_indices = @transform_4, window_bounds = array<i64: 1, 128>}, {transform_indices = @transform_5, window_bounds = array<i64: 1, 8, 128>}]} {
    %c0 = arith.constant 0 : index
    %c0_0 = arith.constant 0 : index
    %c0_1 = arith.constant 0 : index
    %0 = vector.load %arg1[%c0, %c0_0, %c0_1] : memref<1x8x128xbf16, #tpu.memory_space<vmem>>, vector<1x8x128xbf16>
    %1 = vector.shape_cast %0 : vector<1x8x128xbf16> to vector<8x128xbf16>
    %c0_2 = arith.constant 0 : index
    %c0_3 = arith.constant 0 : index
    %2 = vector.load %arg2[%c0_2, %c0_3] : memref<128x384xbf16, #tpu.memory_space<vmem>>, vector<128x384xbf16>
    %cst = arith.constant dense<0.000000e+00> : vector<8x384xf32>
    %3 = tpu.matmul %1, %2, %cst {dimension_numbers = #tpu.dot_dimension_numbers<[1], [0], [0], [1], [0, 0, 1, 1], [], []>} : vector<8x128xbf16>, vector<128x384xbf16>, vector<8x384xf32> -> vector<8x384xf32>
    %c0_4 = arith.constant 0 : index
    %c0_5 = arith.constant 0 : index
    %4 = vector.load %arg4[%c0_4, %c0_5] : memref<1x384xf32, #tpu.memory_space<vmem>>, vector<1x384xf32>
    %5 = vector.broadcast %4 : vector<1x384xf32> to vector<8x384xf32>
    %6 = arith.addf %3, %5 : vector<8x384xf32>
    %7 = vector.extract_strided_slice %6 {offsets = [0, 0], sizes = [8, 128], strides = [1, 1]} : vector<8x384xf32> to vector<8x128xf32>
    %8 = vector.shape_cast %7 : vector<8x128xf32> to vector<1x8x128xf32>
    %9 = vector.extract_strided_slice %6 {offsets = [0, 128], sizes = [8, 128], strides = [1, 1]} : vector<8x384xf32> to vector<8x128xf32>
    %10 = vector.shape_cast %9 : vector<8x128xf32> to vector<1x8x128xf32>
    %11 = vector.extract_strided_slice %6 {offsets = [0, 256], sizes = [8, 128], strides = [1, 1]} : vector<8x384xf32> to vector<8x128xf32>
    %12 = vector.shape_cast %11 : vector<8x128xf32> to vector<1x8x128xf32>
    %13 = arith.truncf %12 : vector<1x8x128xf32> to vector<1x8x128xbf16>
    "tpu.trace_start"() <{level = 10 : i32, message = "bqm,bkm->bqk"}> : () -> ()
    %cst_6 = arith.constant dense<0.000000e+00> : vector<1x8x8xf32>
    %14 = tpu.matmul %8, %10, %cst_6 {dimension_numbers = #tpu.dot_dimension_numbers<[2], [2], [1], [1], [0, 0, 0, 1, 1, 1], [0], [0]>} : vector<1x8x128xf32>, vector<1x8x128xf32>, vector<1x8x8xf32> -> vector<1x8x8xf32>
    "tpu.trace_stop"() : () -> ()
    %cst_7 = arith.constant dense<0xFF800000> : vector<1x8xf32>
    %15 = vector.multi_reduction <maximumf>, %14, %cst_7 [1] : vector<1x8x8xf32> to vector<1x8xf32>
    %16 = vector.shape_cast %15 : vector<1x8xf32> to vector<1x1x8xf32>
    %17 = vector.broadcast %16 : vector<1x1x8xf32> to vector<1x8x8xf32>
    %18 = arith.subf %14, %17 : vector<1x8x8xf32>
    %19 = math.exp %18 : vector<1x8x8xf32>
    %cst_8 = arith.constant dense<0.000000e+00> : vector<1x8xf32>
    %20 = vector.multi_reduction <add>, %19, %cst_8 [1] : vector<1x8x8xf32> to vector<1x8xf32>
    %21 = vector.shape_cast %20 : vector<1x8xf32> to vector<1x1x8xf32>
    %22 = tpu.reciprocal %21 {approx = true} : vector<1x1x8xf32> -> vector<1x1x8xf32>
    %23 = vector.broadcast %22 : vector<1x1x8xf32> to vector<1x8x8xf32>
    %24 = arith.mulf %19, %23 : vector<1x8x8xf32>
    %25 = arith.truncf %24 : vector<1x8x8xf32> to vector<1x8x8xbf16>
    "tpu.trace_start"() <{level = 10 : i32, message = "bqk,bkf->bqf"}> : () -> ()
    %cst_9 = arith.constant dense<0.000000e+00> : vector<1x8x128xf32>
    %26 = tpu.matmul %25, %13, %cst_9 {dimension_numbers = #tpu.dot_dimension_numbers<[2], [1], [1], [2], [0, 0, 0, 1, 1, 2], [0], [0]>} : vector<1x8x8xbf16>, vector<1x8x128xbf16>, vector<1x8x128xf32> -> vector<1x8x128xf32>
    "tpu.trace_stop"() : () -> ()
    %27 = vector.shape_cast %26 : vector<1x8x128xf32> to vector<8x128xf32>
    %28 = arith.truncf %27 : vector<8x128xf32> to vector<8x128xbf16>
    %c0_10 = arith.constant 0 : index
    %c0_11 = arith.constant 0 : index
    %29 = vector.load %arg3[%c0_10, %c0_11] : memref<128x128xbf16, #tpu.memory_space<vmem>>, vector<128x128xbf16>
    %cst_12 = arith.constant dense<0.000000e+00> : vector<8x128xf32>
    %30 = tpu.matmul %28, %29, %cst_12 {dimension_numbers = #tpu.dot_dimension_numbers<[1], [0], [0], [1], [0, 0, 1, 1], [], []>} : vector<8x128xbf16>, vector<128x128xbf16>, vector<8x128xf32> -> vector<8x128xf32>
    %c0_13 = arith.constant 0 : index
    %c0_14 = arith.constant 0 : index
    %31 = vector.load %arg5[%c0_13, %c0_14] : memref<1x128xf32, #tpu.memory_space<vmem>>, vector<1x128xf32>
    %32 = vector.broadcast %31 : vector<1x128xf32> to vector<8x128xf32>
    %33 = arith.addf %30, %32 : vector<8x128xf32>
    %34 = vector.shape_cast %33 : vector<8x128xf32> to vector<1x8x128xf32>
    %c0_15 = arith.constant 0 : index
    %c0_16 = arith.constant 0 : index
    %c0_17 = arith.constant 0 : index
    %35 = vector.load %arg6[%c0_15, %c0_16, %c0_17] : memref<1x8x128xf32, #tpu.memory_space<vmem>>, vector<1x8x128xf32>
    tpu.vector_store %arg6[%c0_15, %c0_16, %c0_17], %34 {strides = array<i32>} : memref<1x8x128xf32, #tpu.memory_space<vmem>>, vector<1x8x128xf32>,
    return
  }
  func.func @transform_0(%arg0: i32) -> (i32, i32, i32) {
    %c0_i32 = arith.constant 0 : i32
    %c0_i32_0 = arith.constant 0 : i32
    %c0_i32_1 = arith.constant 0 : i32
    return %arg0, %c0_i32, %c0_i32_0 : i32, i32, i32
  }
  func.func @transform_1(%arg0: i32) -> (i32, i32) {
    %c0_i32 = arith.constant 0 : i32
    %c0_i32_0 = arith.constant 0 : i32
    %c0_i32_1 = arith.constant 0 : i32
    return %c0_i32, %c0_i32_0 : i32, i32
  }
  func.func @transform_2(%arg0: i32) -> (i32, i32) {
    %c0_i32 = arith.constant 0 : i32
    %c0_i32_0 = arith.constant 0 : i32
    %c0_i32_1 = arith.constant 0 : i32
    return %c0_i32, %c0_i32_0 : i32, i32
  }
  func.func @transform_3(%arg0: i32) -> (i32, i32) {
    %c0_i32 = arith.constant 0 : i32
    %c0_i32_0 = arith.constant 0 : i32
    %c0_i32_1 = arith.constant 0 : i32
    return %c0_i32, %c0_i32_0 : i32, i32
  }
  func.func @transform_4(%arg0: i32) -> (i32, i32) {
    %c0_i32 = arith.constant 0 : i32
    %c0_i32_0 = arith.constant 0 : i32
    %c0_i32_1 = arith.constant 0 : i32
    return %c0_i32, %c0_i32_0 : i32, i32
  }
  func.func @transform_5(%arg0: i32) -> (i32, i32, i32) {
    %c0_i32 = arith.constant 0 : i32
    %c0_i32_0 = arith.constant 0 : i32
    %c0_i32_1 = arith.constant 0 : i32
    return %arg0, %c0_i32, %c0_i32_0 : i32, i32, i32
  }
}

</mosaic_0001>

<llo_original>
// kernel: tpu_custom_call.1
$region0: #{tpu_custom_call.1}
  #allocation0 [shape = 'u32[]', space=smem, size = 0x4, offset = 0x4, fixed_abs, tag = 'smem constant byte address 0x4 - core index']
  #allocation1 [shape = 'u32[144,128]{1,0:T(1,128)}', space=vmem, size = 0x12000, scoped, tag = 'internal scratch']
  %s0 = inlined_call_operand.hbm [shape: bf16[2,8,128], index: 0, kind: input, shape index: {}]
  %s1 = inlined_call_operand.hbm [shape: bf16[128,384], index: 1, kind: input, shape index: {}]
  %s2 = inlined_call_operand.hbm [shape: bf16[128,128], index: 2, kind: input, shape index: {}]
  %s3 = inlined_call_operand.vmem [shape: f32[1,384], index: 3, kind: input, shape index: {}]
  %s4 = inlined_call_operand.vmem [shape: f32[1,128], index: 4, kind: input, shape index: {}]
  %s5 = inlined_call_operand.hbm [shape: f32[2,8,128], index: 5, kind: output, shape index: {}]
  %s6 = sld [smem:[#allocation0]]
  $region65: #{tpu_custom_call.1} parent=0
    _
  %s8 = ssub.s32 1, %s6
  %s9 = scalar_select 0, %s8, %s6
  $region1: #{tpu_custom_call.1} parent=0
    #allocation2 [shape = 'u8[4096]{0}', space=vmem, size = 0x1000, scoped, tag = 'input window, operand 0']
    #allocation3 [shape = 's32[2]{0}', space=sflag, size = 0x8, scoped, tag = 'scoped memory for tpu_custom_call.1']
    #allocation4 [shape = 's32[2]{0}', space=sflag, size = 0x8, scoped, tag = 'scoped memory for tpu_custom_call.1']
    #allocation5 [shape = 'u8[98304]{0}', space=vmem, size = 0x18000, scoped, tag = 'input window, operand 1, single buffered']
    #allocation6 [shape = 's32[1]{0}', space=sflag, size = 0x4, scoped, tag = 'scoped memory for tpu_custom_call.1']
    #allocation7 [shape = 'u8[32768]{0}', space=vmem, size = 0x8000, scoped, tag = 'input window, operand 2, single buffered']
    #allocation8 [shape = 'u8[8192]{0}', space=vmem, size = 0x2000, scoped, tag = 'output window, operand 0']
    %10 = vsyncpa [#allocation3], 0
    %s11 = scalar_lea.sflag [#allocation3], 1
    %12 = vsyncpa %s11, 0
    %13 = vsyncpa [#allocation6], 0
    %14 = vsyncpa [#allocation4], 0
    %s15 = scalar_lea.sflag [#allocation4], 1
    %16 = vsyncpa %s15, 0
    loop: start=0, step=1, limit=4
    $region2: #{tpu_custom_call.1} parent=1 // loop_pre_header
      _
    $region3: #{tpu_custom_call.1} parent=1 // loop_header
      %s18 = sphi 0, %s22
      %p19 = scmp.ge.s32.totalorder %s18, 4
      %s28 = sphi 0, %s30
      %s31 = sphi 0, %s28
      %s32 = sphi 0, %s31
      %s48 = sphi 0, %s32
      %s52 = sphi 0, %s52
      %s54 = sphi 0, %s52
      %s55 = sphi 0, %s54
      %s69 = sphi 0, %s55
      %s73 = sphi 0, %s73
      %s75 = sphi 0, %s73
      %s76 = sphi 0, %s75
      %s90 = sphi 0, %s76
      %s94 = sphi 0, %s94
      %s96 = sphi 0, %s94
      %s97 = sphi 0, %s96
      %s111 = sphi 0, %s97
      %s115 = sphi 0, %s115
      %s117 = sphi 0, %s115
      %s118 = sphi 0, %s117
      %s132 = sphi 0, %s118
      %s138 = sphi 0, %s140
      %s141 = sphi 0, %s138
      %s142 = sphi 0, %s141
      %s158 = sphi 0, %s142
    $region4: #{tpu_custom_call.1} parent=1 // loop_header_branch
      %21 = sbr.rel (%p19) target = $region8
    $region5: #{tpu_custom_call.1} parent=1 // loop_body
      %s23 = ssub.s32 %s18, 1
      %s24 = ssub.s32 %s18, 2
      %s25 = sadd.s32 %s18, 1
      %s26 = ssub.s32 %s18, %s25
      %p27 = scmp.eq.s32.totalorder %s26, 0
      %s29 = sadd.s32 %s28, 1
      %s30 = scalar_select %p27, %s28, %s29
      %p33 = pneg %p27
      %p34 = scmp.eq.s32.totalorder %s18, 1
      %p35 = por %p33, %p34
      %p36 = scmp.ne.s32.totalorder %s28, %s31
      %p37 = scmp.eq.s32.totalorder %s18, 0
      %p38 = por %p36, %p37
      %p39 = scmp.ne.s32.totalorder %s28, %s31
      %p40 = scmp.eq.s32.totalorder %s23, 1
      %p41 = por %p39, %p40
      %p42 = scmp.ne.s32.totalorder %s31, %s32
      %p43 = scmp.eq.s32.totalorder %s23, 0
      %p44 = por %p42, %p43
      %p45 = scmp.ne.s32.totalorder %s31, %s32
      %p46 = scmp.eq.s32.totalorder %s24, 1
      %p47 = por %p45, %p46
      %p49 = scmp.ne.s32.totalorder %s32, %s48
      %p50 = scmp.eq.s32.totalorder %s24, 0
      %p51 = por %p49, %p50
      %s53 = sadd.s32 %s52, 1
      %p56 = scmp.eq.s32.totalorder %s18, 1
      %p57 = scmp.ne.s32.totalorder %s52, %s54
      %p58 = scmp.eq.s32.totalorder %s18, 0
      %p59 = por %p57, %p58
      %p60 = scmp.ne.s32.totalorder %s52, %s54
      %p61 = scmp.eq.s32.totalorder %s23, 1
      %p62 = por %p60, %p61
      %p63 = scmp.ne.s32.totalorder %s54, %s55
      %p64 = scmp.eq.s32.totalorder %s23, 0
      %p65 = por %p63, %p64
      %p66 = scmp.ne.s32.totalorder %s54, %s55
      %p67 = scmp.eq.s32.totalorder %s24, 1
      %p68 = por %p66, %p67
      %p70 = scmp.ne.s32.totalorder %s55, %s69
      %p71 = scmp.eq.s32.totalorder %s24, 0
      %p72 = por %p70, %p71
      %s74 = sadd.s32 %s73, 1
      %p77 = scmp.eq.s32.totalorder %s18, 1
      %p78 = scmp.ne.s32.totalorder %s73, %s75
      %p79 = scmp.eq.s32.totalorder %s18, 0
      %p80 = por %p78, %p79
      %p81 = scmp.ne.s32.totalorder %s73, %s75
      %p82 = scmp.eq.s32.totalorder %s23, 1
      %p83 = por %p81, %p82
      %p84 = scmp.ne.s32.totalorder %s75, %s76
      %p85 = scmp.eq.s32.totalorder %s23, 0
      %p86 = por %p84, %p85
      %p87 = scmp.ne.s32.totalorder %s75, %s76
      %p88 = scmp.eq.s32.totalorder %s24, 1
      %p89 = por %p87, %p88
      %p91 = scmp.ne.s32.totalorder %s76, %s90
      %p92 = scmp.eq.s32.totalorder %s24, 0
      %p93 = por %p91, %p92
      %s95 = sadd.s32 %s94, 1
      %p98 = scmp.eq.s32.totalorder %s18, 1
      %p99 = scmp.ne.s32.totalorder %s94, %s96
      %p100 = scmp.eq.s32.totalorder %s18, 0
      %p101 = por %p99, %p100
      %p102 = scmp.ne.s32.totalorder %s94, %s96
      %p103 = scmp.eq.s32.totalorder %s23, 1
      %p104 = por %p102, %p103
      %p105 = scmp.ne.s32.totalorder %s96, %s97
      %p106 = scmp.eq.s32.totalorder %s23, 0
      %p107 = por %p105, %p106
      %p108 = scmp.ne.s32.totalorder %s96, %s97
      %p109 = scmp.eq.s32.totalorder %s24, 1
      %p110 = por %p108, %p109
      %p112 = scmp.ne.s32.totalorder %s97, %s111
      %p113 = scmp.eq.s32.totalorder %s24, 0
      %p114 = por %p112, %p113
      %s116 = sadd.s32 %s115, 1
      %p119 = scmp.eq.s32.totalorder %s18, 1
      %p120 = scmp.ne.s32.totalorder %s115, %s117
      %p121 = scmp.eq.s32.totalorder %s18, 0
      %p122 = por %p120, %p121
      %p123 = scmp.ne.s32.totalorder %s115, %s117
      %p124 = scmp.eq.s32.totalorder %s23, 1
      %p125 = por %p123, %p124
      %p126 = scmp.ne.s32.totalorder %s117, %s118
      %p127 = scmp.eq.s32.totalorder %s23, 0
      %p128 = por %p126, %p127
      %p129 = scmp.ne.s32.totalorder %s117, %s118
      %p130 = scmp.eq.s32.totalorder %s24, 1
      %p131 = por %p129, %p130
      %p133 = scmp.ne.s32.totalorder %s118, %s132
      %p134 = scmp.eq.s32.totalorder %s24, 0
      %p135 = por %p133, %p134
      %s136 = ssub.s32 %s18, %s25
      %p137 = scmp.eq.s32.totalorder %s136, 0
      %s139 = sadd.s32 %s138, 1
      %s140 = scalar_select %p137, %s138, %s139
      %p143 = pneg %p137
      %p144 = scmp.eq.s32.totalorder %s18, 1
      %p145 = por %p143, %p144
      %p146 = scmp.ne.s32.totalorder %s138, %s141
      %p147 = scmp.eq.s32.totalorder %s18, 0
      %p148 = por %p146, %p147
      %p149 = scmp.ne.s32.totalorder %s138, %s141
      %p150 = scmp.eq.s32.totalorder %s23, 1
      %p151 = por %p149, %p150
      %p152 = scmp.ne.s32.totalorder %s141, %s142
      %p153 = scmp.eq.s32.totalorder %s23, 0
      %p154 = por %p152, %p153
      %p155 = scmp.ne.s32.totalorder %s141, %s142
      %p156 = scmp.eq.s32.totalorder %s24, 1
      %p157 = por %p155, %p156
      %p159 = scmp.ne.s32.totalorder %s142, %s158
      %p160 = scmp.eq.s32.totalorder %s24, 0
      %p161 = por %p159, %p160
      %p162 = scmp.le.s32.totalorder 1, %s18
      %p163 = scmp.lt.s32.totalorder %s18, 3
      %p164 = pnand %p162, %p163
      %p165 = pneg %p164
      // Predicated region
      $region9: #{tpu_custom_call.1} parent=5 // pred_check
        _
      $region10: #{tpu_custom_call.1} parent=5 // pred_check_branch
        %167 = sbr.rel (%p164) target = $region12
      $region11: #{tpu_custom_call.1} parent=5 // pred_region
        %s168 = ssub.s32 %s18, 1
        // Predicated region
        $region13: #{tpu_custom_call.1} parent=11 // pred_check
          %p169 = pneg %p65
        $region14: #{tpu_custom_call.1} parent=11 // pred_check_branch
          %171 = sbr.rel (%p169) target = $region16
        $region15: #{tpu_custom_call.1} parent=11 // pred_region
          %s173 = ssub.s32 3072, 3072
          %174 = vsyncadd [#allocation6], %s173
          %s175 = sshll.u32 [#allocation5], 4
          %s176 = int_to_ptr.vmem [resolvable:$true] %s175
          %181 = dma.hbm_to_vmem [thread:$0]  %s1, 3072, %s176, [#allocation6], 192, 192, 12
        $region16: #{tpu_custom_call.1} parent=11 // pred_fallthru
          _
        // Predicated region
        $region17: #{tpu_custom_call.1} parent=11 // pred_check
          %p182 = pneg %p86
        $region18: #{tpu_custom_call.1} parent=11 // pred_check_branch
          %184 = sbr.rel (%p182) target = $region20
        $region19: #{tpu_custom_call.1} parent=11 // pred_region
          %s186 = ssub.s32 1024, 1024
          %187 = vsyncadd [#allocation6], %s186
          %s188 = sshll.u32 [#allocation7], 4
          %s189 = int_to_ptr.vmem [resolvable:$true] %s188
          %194 = dma.hbm_to_vmem [thread:$0]  %s2, 1024, %s189, [#allocation6], 64, 64, 4
        $region20: #{tpu_custom_call.1} parent=11 // pred_fallthru
          _
        // Predicated region
        $region21: #{tpu_custom_call.1} parent=11 // pred_check
          %p195 = pneg %p107
        $region22: #{tpu_custom_call.1} parent=11 // pred_check_branch
          %197 = sbr.rel (%p195) target = $region24
        $region23: #{tpu_custom_call.1} parent=11 // pred_region
          _
        $region24: #{tpu_custom_call.1} parent=11 // pred_fallthru
          _
        // Predicated region
        $region25: #{tpu_custom_call.1} parent=11 // pred_check
          %p198 = pneg %p128
        $region26: #{tpu_custom_call.1} parent=11 // pred_check_branch
          %200 = sbr.rel (%p198) target = $region28
        $region27: #{tpu_custom_call.1} parent=11 // pred_region
          _
        $region28: #{tpu_custom_call.1} parent=11 // pred_fallthru
          _
      $region12: #{tpu_custom_call.1} parent=5 // pred_fallthru
        _
      %p201 = scmp.lt.s32.totalorder %s18, 2
      // Predicated region
      $region29: #{tpu_custom_call.1} parent=5 // pred_check
        %p202 = pneg %p201
      $region30: #{tpu_custom_call.1} parent=5 // pred_check_branch
        %204 = sbr.rel (%p202) target = $region32
      $region31: #{tpu_custom_call.1} parent=5 // pred_region
        // Predicated region
        $region33: #{tpu_custom_call.1} parent=31 // pred_check
          %p205 = pneg %p38
        $region34: #{tpu_custom_call.1} parent=31 // pred_check_branch
          %207 = sbr.rel (%p205) target = $region36
        $region35: #{tpu_custom_call.1} parent=31 // pred_region
          %s208 = sand.u32 %s28, 1
          %s209 = scalar_lea.sflag [#allocation3], %s208
          %s210 = sand.u32 %s28, 1
          %s211 = smul.addr %s210, 4
          %s212 = scalar_lea.vmem [#allocation2], %s211
          %s214 = ssub.s32 64, 64
          %215 = vsyncadd %s209, %s214
          %s216 = smul.addr %s18, 64
          %s217 = scalar_lea.hbm %s0, %s216
          %s219 = sshll.u32 %s212, 4
          %s220 = int_to_ptr.vmem [resolvable:$true] %s219
          %222 = dma.hbm_to_vmem [thread:$0]  %s217, 64, %s220, %s209
        $region36: #{tpu_custom_call.1} parent=31 // pred_fallthru
          _
      $region32: #{tpu_custom_call.1} parent=5 // pred_fallthru
        _
      %p223 = scmp.le.s32.totalorder 1, %s18
      %p224 = scmp.lt.s32.totalorder %s18, 3
      %p225 = pnand %p223, %p224
      %p226 = pneg %p225
      // Predicated region
      $region37: #{tpu_custom_call.1} parent=5 // pred_check
        _
      $region38: #{tpu_custom_call.1} parent=5 // pred_check_branch
        %228 = sbr.rel (%p225) target = $region40
      $region39: #{tpu_custom_call.1} parent=5 // pred_region
        %s229 = ssub.s32 %s18, 1
        %s230 = sand.u32 %s31, 1
        %s231 = scalar_lea.sflag [#allocation3], %s230
        %s232 = sand.u32 %s31, 1
        %s233 = smul.addr %s232, 4
        %s234 = scalar_lea.vmem [#allocation2], %s233
        // Predicated region
        $region41: #{tpu_custom_call.1} parent=39 // pred_check
          %p235 = pneg %p44
        $region42: #{tpu_custom_call.1} parent=39 // pred_check_branch
          %237 = sbr.rel (%p235) target = $region44
        $region43: #{tpu_custom_call.1} parent=39 // pred_region
          %238 = dma.done %s231, 64
        $region44: #{tpu_custom_call.1} parent=39 // pred_fallthru
          _
        // Predicated region
        $region45: #{tpu_custom_call.1} parent=39 // pred_check
          %p239 = pneg %p65
        $region46: #{tpu_custom_call.1} parent=39 // pred_check_branch
          %241 = sbr.rel (%p239) target = $region48
        $region47: #{tpu_custom_call.1} parent=39 // pred_region
          %242 = dma.done [#allocation6], 3072
        $region48: #{tpu_custom_call.1} parent=39 // pred_fallthru
          _
        // Predicated region
        $region49: #{tpu_custom_call.1} parent=39 // pred_check
          %p243 = pneg %p86
        $region50: #{tpu_custom_call.1} parent=39 // pred_check_branch
          %245 = sbr.rel (%p243) target = $region52
        $region51: #{tpu_custom_call.1} parent=39 // pred_region
          %246 = dma.done [#allocation6], 1024
        $region52: #{tpu_custom_call.1} parent=39 // pred_fallthru
          _
        %s247 = sand.u32 %s31, 1
        %s248 = scalar_lea.sflag [#allocation3], %s247
        %s249 = sand.u32 %s31, 1
        %s250 = smul.addr %s249, 4
        %s251 = scalar_lea.vmem [#allocation2], %s250
        %p252 = pneg %p44
        %p253 = pneg %p41
        %p254 = pneg %p65
        %p255 = pneg %p62
        %p256 = pneg %p86
        %p257 = pneg %p83
        %p258 = pneg %p107
        %p259 = pneg %p104
        %p260 = pneg %p128
        %p261 = pneg %p125
        %p262 = pneg %p154
        %p263 = pneg %p151
        %s264 = sand.u32 %s141, 1
        %s265 = scalar_lea.sflag [#allocation4], %s264
        %s266 = sand.u32 %s141, 1
        %s267 = smul.addr %s266, 8
        %s268 = scalar_lea.vmem [#allocation8], %s267
        %v270 = vld [vmem:[%s234] sm:$0xf]
        %v271 = vld [vmem:[#allocation5] sm:$0xff]
        %v272 = vld [vmem:[#allocation5 + $0x8] sm:$0xf]
        %v273 = vld [vmem:[#allocation5 + $0xc] sm:$0xff]
        %v274 = vld [vmem:[#allocation5 + $0x14] sm:$0xf]
        %v275 = vld [vmem:[#allocation5 + $0x18] sm:$0xff]
        %v276 = vld [vmem:[#allocation5 + $0x20] sm:$0xf]
        %v277 = vld [vmem:[#allocation5 + $0x24] sm:$0xff]
        %v278 = vld [vmem:[#allocation5 + $0x2c] sm:$0xf]
        %v279 = vld [vmem:[#allocation5 + $0x30] sm:$0xff]
        %v280 = vld [vmem:[#allocation5 + $0x38] sm:$0xf]
        %v281 = vld [vmem:[#allocation5 + $0x3c] sm:$0xff]
        %v282 = vld [vmem:[#allocation5 + $0x44] sm:$0xf]
        %v283 = vld [vmem:[#allocation5 + $0x48] sm:$0xff]
        %v284 = vld [vmem:[#allocation5 + $0x50] sm:$0xf]
        %v285 = vld [vmem:[#allocation5 + $0x54] sm:$0xff]
        %v286 = vld [vmem:[#allocation5 + $0x5c] sm:$0xf]
        %v287 = vld [vmem:[#allocation5 + $0x60] sm:$0xff]
        %v288 = vld [vmem:[#allocation5 + $0x68] sm:$0xf]
        %v289 = vld [vmem:[#allocation5 + $0x6c] sm:$0xff]
        %v290 = vld [vmem:[#allocation5 + $0x74] sm:$0xf]
        %v291 = vld [vmem:[#allocation5 + $0x78] sm:$0xff]
        %v292 = vld [vmem:[#allocation5 + $0x80] sm:$0xf]
        %v293 = vld [vmem:[#allocation5 + $0x84] sm:$0xff]
        %v294 = vld [vmem:[#allocation5 + $0x8c] sm:$0xf]
        %v295 = vld [vmem:[#allocation5 + $0x90] sm:$0xff]
        %v296 = vld [vmem:[#allocation5 + $0x98] sm:$0xf]
        %v297 = vld [vmem:[#allocation5 + $0x9c] sm:$0xff]
        %v298 = vld [vmem:[#allocation5 + $0xa4] sm:$0xf]
        %v299 = vld [vmem:[#allocation5 + $0xa8] sm:$0xff]
        %v300 = vld [vmem:[#allocation5 + $0xb0] sm:$0xf]
        %v301 = vld [vmem:[#allocation5 + $0xb4] sm:$0xff]
        %v302 = vld [vmem:[#allocation5 + $0xbc] sm:$0xf]
        %v303 = vld [vmem:[%s3] sm:$0x7]
        %v305 = vlaneseq
        %v306 = vshrl.u32 %v305, 7
        %v307 = vsub.s32 0, %v306
        %v308 = vrot.slane %v303, %v307
        %v309 = vlaneseq
        %v310 = vshrl.u32 %v309, 7
        %v311 = vsub.s32 1, %v310
        %v312 = vrot.slane %v303, %v311
        %v313 = vlaneseq
        %v314 = vshrl.u32 %v313, 7
        %v315 = vsub.s32 2, %v314
        %v316 = vrot.slane %v303, %v315
        %v352 = vunpack.c.l.b16 %v271
        %v353 = vunpack.c.h.b16 %v271
        %v354 = vunpack.c.l.b16 %v272
        %v355 = vunpack.c.l.b16 %v273
        %v356 = vunpack.c.h.b16 %v273
        %v357 = vunpack.c.l.b16 %v274
        %v358 = vunpack.c.l.b16 %v275
        %v359 = vunpack.c.h.b16 %v275
        %v360 = vunpack.c.l.b16 %v276
        %v361 = vunpack.c.l.b16 %v277
        %v362 = vunpack.c.h.b16 %v277
        %v363 = vunpack.c.l.b16 %v278
        %v364 = vunpack.c.l.b16 %v279
        %v365 = vunpack.c.h.b16 %v279
        %v366 = vunpack.c.l.b16 %v280
        %v367 = vunpack.c.l.b16 %v281
        %v368 = vunpack.c.h.b16 %v281
        %v369 = vunpack.c.l.b16 %v282
        %v370 = vunpack.c.l.b16 %v283
        %v371 = vunpack.c.h.b16 %v283
        %v372 = vunpack.c.l.b16 %v284
        %v373 = vunpack.c.l.b16 %v285
        %v374 = vunpack.c.h.b16 %v285
        %v375 = vunpack.c.l.b16 %v286
        %v376 = vunpack.c.l.b16 %v287
        %v377 = vunpack.c.h.b16 %v287
        %v378 = vunpack.c.l.b16 %v288
        %v379 = vunpack.c.l.b16 %v289
        %v380 = vunpack.c.h.b16 %v289
        %v381 = vunpack.c.l.b16 %v290
        %v382 = vunpack.c.l.b16 %v291
        %v383 = vunpack.c.h.b16 %v291
        %v384 = vunpack.c.l.b16 %v292
        %v385 = vunpack.c.l.b16 %v293
        %v386 = vunpack.c.h.b16 %v293
        %v387 = vunpack.c.l.b16 %v294
        %v388 = vunpack.c.l.b16 %v295
        %v389 = vunpack.c.h.b16 %v295
        %v390 = vunpack.c.l.b16 %v296
        %v391 = vunpack.c.l.b16 %v297
        %v392 = vunpack.c.h.b16 %v297
        %v393 = vunpack.c.l.b16 %v298
        %v394 = vunpack.c.l.b16 %v299
        %v395 = vunpack.c.h.b16 %v299
        %v396 = vunpack.c.l.b16 %v300
        %v397 = vunpack.c.l.b16 %v301
        %v398 = vunpack.c.h.b16 %v301
        %v399 = vunpack.c.l.b16 %v302
        %v400 = vpack.c.b16 %v355, %v352
        %v401 = vpack.c.b16 %v356, %v353
        %v402 = vpack.c.b16 %v357, %v354
        %v403 = vpack.c.b16 %v361, %v358
        %v404 = vpack.c.b16 %v362, %v359
        %v405 = vpack.c.b16 %v363, %v360
        %v406 = vpack.c.b16 %v367, %v364
        %v407 = vpack.c.b16 %v368, %v365
        %v408 = vpack.c.b16 %v369, %v366
        %v409 = vpack.c.b16 %v373, %v370
        %v410 = vpack.c.b16 %v374, %v371
        %v411 = vpack.c.b16 %v375, %v372
        %v412 = vpack.c.b16 %v379, %v376
        %v413 = vpack.c.b16 %v380, %v377
        %v414 = vpack.c.b16 %v381, %v378
        %v415 = vpack.c.b16 %v385, %v382
        %v416 = vpack.c.b16 %v386, %v383
        %v417 = vpack.c.b16 %v387, %v384
        %v418 = vpack.c.b16 %v391, %v388
        %v419 = vpack.c.b16 %v392, %v389
        %v420 = vpack.c.b16 %v393, %v390
        %v421 = vpack.c.b16 %v397, %v394
        %v422 = vpack.c.b16 %v398, %v395
        %v423 = vpack.c.b16 %v399, %v396
        %448 = vmatprep.subr.bf16.mxu0 %v422
        %449 = vmatpush1.bf16.msra.mxu0 %v421
        %450 = vmatprep.subr.bf16.mxu0 %v419
        %451 = vmatpush1.bf16.msra.mxu0 %v418
        %452 = vmatprep.subr.bf16.mxu0 %v416
        %453 = vmatpush1.bf16.msra.mxu0 %v415
        %454 = vmatprep.subr.bf16.mxu0 %v413
        %455 = vmatpush1.bf16.msra.mxu0 %v412
        %456 = vmatprep.subr.bf16.mxu0 %v410
        %457 = vmatpush1.bf16.msra.mxu0 %v409
        %458 = vmatprep.subr.bf16.mxu0 %v407
        %459 = vmatpush1.bf16.msra.mxu0 %v406
        %460 = vmatprep.subr.bf16.mxu0 %v404
        %461 = vmatpush1.bf16.msra.mxu0 %v403
        %462 = vmatprep.subr.bf16.mxu0 %v401
        %463 = vmatpush1.bf16.msra.mxu0 %v400
        %464 = vmatprep.subr.bf16.mxu0 0
        %465 = vmatpush2.bf16.msra.mxu0 0
        %466 = vmatprep.subr.bf16.mxu0 0
        %467 = vmatpush2.bf16.msra.mxu0 0
        %468 = vmatprep.subr.bf16.mxu0 0
        %469 = vmatpush2.bf16.msra.mxu0 0
        %470 = vmatprep.subr.bf16.mxu0 0
        %471 = vmatpush2.bf16.msra.mxu0 0
        %472 = vmatprep.subr.bf16.mxu0 0
        %473 = vmatpush2.bf16.msra.mxu0 0
        %474 = vmatprep.subr.bf16.mxu0 0
        %475 = vmatpush2.bf16.msra.mxu0 0
        %476 = vmatprep.subr.bf16.mxu0 0
        %477 = vmatpush2.bf16.msra.mxu0 0
        %478 = vmatprep.subr.bf16.mxu0 0
        %479 = vmatpush2.bf16.msra.mxu0 0
        %480 = vmatprep.mubr.bf16.mxu0 0
        %481 = vmatmul.mubr.bf16.gmra.mxu0 %v270
        %v482 = vpop.f32.mrf.mxu0
        %v483 = vadd.f32 %v308, %v482
        %v484 = vpop.f32.mrf.mxu0
        %v485 = vadd.f32 %v312, %v484
        %v486 = vpop.f32.mrf.mxu0
        %v487 = vpop.f32.mrf.mxu0
        %488 = vdwg.mxu0
        %489 = vmatprep.subr.bf16.mxu0 0
        %490 = vmatpush1.bf16.msra.mxu0 %v423
        %491 = vmatprep.subr.bf16.mxu0 0
        %492 = vmatpush1.bf16.msra.mxu0 %v420
        %493 = vmatprep.subr.bf16.mxu0 0
        %494 = vmatpush1.bf16.msra.mxu0 %v417
        %495 = vmatprep.subr.bf16.mxu0 0
        %496 = vmatpush1.bf16.msra.mxu0 %v414
        %497 = vmatprep.subr.bf16.mxu0 0
        %498 = vmatpush1.bf16.msra.mxu0 %v411
        %499 = vmatprep.subr.bf16.mxu0 0
        %500 = vmatpush1.bf16.msra.mxu0 %v408
        %501 = vmatprep.subr.bf16.mxu0 0
        %502 = vmatpush1.bf16.msra.mxu0 %v405
        %503 = vmatprep.subr.bf16.mxu0 0
        %504 = vmatpush1.bf16.msra.mxu0 %v402
        %505 = vmatprep.subr.bf16.mxu0 0
        %506 = vmatpush2.bf16.msra.mxu0 0
        %507 = vmatprep.subr.bf16.mxu0 0
        %508 = vmatpush2.bf16.msra.mxu0 0
        %509 = vmatprep.subr.bf16.mxu0 0
        %510 = vmatpush2.bf16.msra.mxu0 0
        %511 = vmatprep.subr.bf16.mxu0 0
        %512 = vmatpush2.bf16.msra.mxu0 0
        %513 = vmatprep.subr.bf16.mxu0 0
        %514 = vmatpush2.bf16.msra.mxu0 0
        %515 = vmatprep.subr.bf16.mxu0 0
        %516 = vmatpush2.bf16.msra.mxu0 0
        %517 = vmatprep.subr.bf16.mxu0 0
        %518 = vmatpush2.bf16.msra.mxu0 0
        %519 = vmatprep.subr.bf16.mxu0 0
        %520 = vmatpush2.bf16.msra.mxu0 0
        %521 = vmatprep.mubr.bf16.mxu0 0
        %522 = vmatmul.mubr.bf16.gmra.mxu0 %v270
        %v523 = vpop.f32.mrf.mxu0
        %v524 = vadd.f32 %v316, %v523
        %v525 = vpop.f32.mrf.mxu0
        %v526 = vpop.f32.mrf.mxu0
        %v527 = vpop.f32.mrf.mxu0
        %528 = vdwg.mxu0
        %v529 = vpack.c.bf16 %v524, %v524
        %530 = vmatprep.subr.mxu0 0.0
        %531 = vmatpush1.xpose.msra.mxu0 0.0
        %532 = vmatprep.subr.mxu0 0.0
        %533 = vmatpush1.xpose.msra.mxu0 0.0
        %534 = vmatprep.subr.mxu0 0.0
        %535 = vmatpush1.xpose.msra.mxu0 0.0
        %536 = vmatprep.subr.mxu0 0.0
        %537 = vmatpush1.xpose.msra.mxu0 0.0
        %538 = vmatprep.subr.mxu0 0.0
        %539 = vmatpush1.xpose.msra.mxu0 0.0
        %540 = vmatprep.subr.mxu0 0.0
        %541 = vmatpush1.xpose.msra.mxu0 0.0
        %542 = vmatprep.subr.mxu0 0.0
        %543 = vmatpush1.xpose.msra.mxu0 0.0
        %544 = vmatprep.subr.mxu0 0.0
        %545 = vmatpush1.xpose.msra.mxu0 0.0
        %546 = vmatprep.subr.mxu0 0.0
        %547 = vmatpush1.xpose.msra.mxu0 0.0
        %548 = vmatprep.subr.mxu0 0.0
        %549 = vmatpush1.xpose.msra.mxu0 0.0
        %550 = vmatprep.subr.mxu0 0.0
        %551 = vmatpush1.xpose.msra.mxu0 0.0
        %552 = vmatprep.subr.mxu0 0.0
        %553 = vmatpush1.xpose.msra.mxu0 0.0
        %554 = vmatprep.subr.mxu0 0.0
        %555 = vmatpush1.xpose.msra.mxu0 0.0
        %556 = vmatprep.subr.mxu0 0.0
        %557 = vmatpush1.xpose.msra.mxu0 0.0
        %558 = vmatprep.subr.mxu0 0.0
        %559 = vmatpush1.xpose.msra.mxu0 0.0
        %560 = vmatprep.subr.mxu0 0.0
        %561 = vmatpush1.xpose.msra.mxu0 %v485
        %562 = vmatprep.subr.mxu0 0.0
        %563 = vmatpush2.xpose.msra.mxu0 0.0
        %564 = vmatprep.subr.mxu0 0.0
        %565 = vmatpush2.xpose.msra.mxu0 0.0
        %566 = vmatprep.subr.mxu0 0.0
        %567 = vmatpush2.xpose.msra.mxu0 0.0
        %568 = vmatprep.subr.mxu0 0.0
        %569 = vmatpush2.xpose.msra.mxu0 0.0
        %570 = vmatprep.subr.mxu0 0.0
        %571 = vmatpush2.xpose.msra.mxu0 0.0
        %572 = vmatprep.subr.mxu0 0.0
        %573 = vmatpush2.xpose.msra.mxu0 0.0
        %574 = vmatprep.subr.mxu0 0.0
        %575 = vmatpush2.xpose.msra.mxu0 0.0
        %576 = vmatprep.subr.mxu0 0.0
        %577 = vmatpush2.xpose.msra.mxu0 0.0
        %578 = vmatprep.subr.mxu0 0.0
        %579 = vmatpush2.xpose.msra.mxu0 0.0
        %580 = vmatprep.subr.mxu0 0.0
        %581 = vmatpush2.xpose.msra.mxu0 0.0
        %582 = vmatprep.subr.mxu0 0.0
        %583 = vmatpush2.xpose.msra.mxu0 0.0
        %584 = vmatprep.subr.mxu0 0.0
        %585 = vmatpush2.xpose.msra.mxu0 0.0
        %586 = vmatprep.subr.mxu0 0.0
        %587 = vmatpush2.xpose.msra.mxu0 0.0
        %588 = vmatprep.subr.mxu0 0.0
        %589 = vmatpush2.xpose.msra.mxu0 0.0
        %590 = vmatprep.subr.mxu0 0.0
        %591 = vmatpush2.xpose.msra.mxu0 0.0
        %592 = vmatprep.subr.mxu0 0.0
        %593 = vmatpush2.xpose.msra.mxu0 0.0
        %594 = vmatprep.mubr.f32.mxu0 0.0
        %595 = vmatmul.mubr.f32.gmra.mxu0 %v483
        %v596 = vpop.f32.mrf.mxu0
        %v597 = vadd.f32 0.0, %v596
        %v598 = vpop.f32.mrf.mxu0
        %599 = vdwg.mxu0
        %vm600 = vcmask 64512
        %v601 = vsel %vm600, %v597, -inf
        %v602 = vrot.slane %v601, 4
        %v603 = vmax.f32 %v601, %v602
        %v604 = vrot.slane %v603, 2
        %v605 = vmax.f32 %v603, %v604
        %v606 = vrot.slane %v605, 1
        %v607 = vmax.f32 %v605, %v606
        %v608 = vsub.f32 %v597, %v607
        %v609 = vmul.f32 %v608, 1.442695
        %v610 = vpow.pop %v609
        %v611 = vsel %vm600, %v610, 0.0
        %v612 = vrot.slane %v611, 4
        %v613 = vadd.f32 %v611, %v612
        %v614 = vrot.slane %v613, 2
        %v615 = vadd.f32 %v613, %v614
        %v616 = vrot.slane %v615, 1
        %v617 = vadd.f32 %v615, %v616
        %v618 = vrcp.pop %v617
        %v619 = vmul.f32 %v610, %v618
        %v620 = vpack.c.bf16 %v619, %v619
        %v622 = vsel %vm600, %v620, 0
        %vm624 = vcmask 1043456
        %v626 = vsel %vm624, %v529, 0
        %628 = vmatprep.subr.bf16.mxu0 0
        %629 = vmatpush1.bf16.msra.mxu0 0
        %630 = vmatprep.subr.bf16.mxu0 0
        %631 = vmatpush1.bf16.msra.mxu0 0
        %632 = vmatprep.subr.bf16.mxu0 0
        %633 = vmatpush1.bf16.msra.mxu0 0
        %634 = vmatprep.subr.bf16.mxu0 0
        %635 = vmatpush1.bf16.msra.mxu0 0
        %636 = vmatprep.subr.bf16.mxu0 0
        %637 = vmatpush1.bf16.msra.mxu0 0
        %638 = vmatprep.subr.bf16.mxu0 0
        %639 = vmatpush1.bf16.msra.mxu0 0
        %640 = vmatprep.subr.bf16.mxu0 0
        %641 = vmatpush1.bf16.msra.mxu0 0
        %642 = vmatprep.subr.bf16.mxu0 0
        %643 = vmatpush1.bf16.msra.mxu0 %v626
        %644 = vmatprep.subr.bf16.mxu0 0
        %645 = vmatpush2.bf16.msra.mxu0 0
        %646 = vmatprep.subr.bf16.mxu0 0
        %647 = vmatpush2.bf16.msra.mxu0 0
        %648 = vmatprep.subr.bf16.mxu0 0
        %649 = vmatpush2.bf16.msra.mxu0 0
        %650 = vmatprep.subr.bf16.mxu0 0
        %651 = vmatpush2.bf16.msra.mxu0 0
        %652 = vmatprep.subr.bf16.mxu0 0
        %653 = vmatpush2.bf16.msra.mxu0 0
        %654 = vmatprep.subr.bf16.mxu0 0
        %655 = vmatpush2.bf16.msra.mxu0 0
        %656 = vmatprep.subr.bf16.mxu0 0
        %657 = vmatpush2.bf16.msra.mxu0 0
        %658 = vmatprep.subr.bf16.mxu0 0
        %659 = vmatpush2.bf16.msra.mxu0 0
        %660 = vmatprep.mubr.bf16.mxu0 0
        %661 = vmatmul.mubr.bf16.gmra.mxu0 %v622
        %v662 = vpop.f32.mrf.mxu0
        %v663 = vadd.f32 0.0, %v662
        %v664 = vpop.f32.mrf.mxu0
        %v665 = vpop.f32.mrf.mxu0
        %v666 = vpop.f32.mrf.mxu0
        %667 = vdwg.mxu0
        %v668 = vpack.c.bf16 %v663, %v663
        %v669 = vld [vmem:[#allocation7] sm:$0xf]
        %v670 = vld [vmem:[#allocation7 + $0x4] sm:$0xf]
        %v671 = vld [vmem:[#allocation7 + $0x8] sm:$0xf]
        %v672 = vld [vmem:[#allocation7 + $0xc] sm:$0xf]
        %v673 = vld [vmem:[#allocation7 + $0x10] sm:$0xf]
        %v674 = vld [vmem:[#allocation7 + $0x14] sm:$0xf]
        %v675 = vld [vmem:[#allocation7 + $0x18] sm:$0xf]
        %v676 = vld [vmem:[#allocation7 + $0x1c] sm:$0xf]
        %v677 = vld [vmem:[#allocation7 + $0x20] sm:$0xf]
        %v678 = vld [vmem:[#allocation7 + $0x24] sm:$0xf]
        %v679 = vld [vmem:[#allocation7 + $0x28] sm:$0xf]
        %v680 = vld [vmem:[#allocation7 + $0x2c] sm:$0xf]
        %v681 = vld [vmem:[#allocation7 + $0x30] sm:$0xf]
        %v682 = vld [vmem:[#allocation7 + $0x34] sm:$0xf]
        %v683 = vld [vmem:[#allocation7 + $0x38] sm:$0xf]
        %v684 = vld [vmem:[#allocation7 + $0x3c] sm:$0xf]
        %v685 = vld [vmem:[%s4] sm:$0x1]
        %v687 = vlaneseq
        %v688 = vshrl.u32 %v687, 7
        %v689 = vsub.s32 0, %v688
        %v690 = vrot.slane %v685, %v689
        %v708 = vunpack.c.l.b16 %v669
        %v709 = vunpack.c.l.b16 %v670
        %v710 = vunpack.c.l.b16 %v671
        %v711 = vunpack.c.l.b16 %v672
        %v712 = vunpack.c.l.b16 %v673
        %v713 = vunpack.c.l.b16 %v674
        %v714 = vunpack.c.l.b16 %v675
        %v715 = vunpack.c.l.b16 %v676
        %v716 = vunpack.c.l.b16 %v677
        %v717 = vunpack.c.l.b16 %v678
        %v718 = vunpack.c.l.b16 %v679
        %v719 = vunpack.c.l.b16 %v680
        %v720 = vunpack.c.l.b16 %v681
        %v721 = vunpack.c.l.b16 %v682
        %v722 = vunpack.c.l.b16 %v683
        %v723 = vunpack.c.l.b16 %v684
        %v724 = vpack.c.b16 %v709, %v708
        %v725 = vpack.c.b16 %v711, %v710
        %v726 = vpack.c.b16 %v713, %v712
        %v727 = vpack.c.b16 %v715, %v714
        %v728 = vpack.c.b16 %v717, %v716
        %v729 = vpack.c.b16 %v719, %v718
        %v730 = vpack.c.b16 %v721, %v720
        %v731 = vpack.c.b16 %v723, %v722
        %740 = vmatprep.subr.bf16.mxu0 0
        %741 = vmatpush1.bf16.msra.mxu0 %v731
        %742 = vmatprep.subr.bf16.mxu0 0
        %743 = vmatpush1.bf16.msra.mxu0 %v730
        %744 = vmatprep.subr.bf16.mxu0 0
        %745 = vmatpush1.bf16.msra.mxu0 %v729
        %746 = vmatprep.subr.bf16.mxu0 0
        %747 = vmatpush1.bf16.msra.mxu0 %v728
        %748 = vmatprep.subr.bf16.mxu0 0
        %749 = vmatpush1.bf16.msra.mxu0 %v727
        %750 = vmatprep.subr.bf16.mxu0 0
        %751 = vmatpush1.bf16.msra.mxu0 %v726
        %752 = vmatprep.subr.bf16.mxu0 0
        %753 = vmatpush1.bf16.msra.mxu0 %v725
        %754 = vmatprep.subr.bf16.mxu0 0
        %755 = vmatpush1.bf16.msra.mxu0 %v724
        %756 = vmatprep.subr.bf16.mxu0 0
        %757 = vmatpush2.bf16.msra.mxu0 0
        %758 = vmatprep.subr.bf16.mxu0 0
        %759 = vmatpush2.bf16.msra.mxu0 0
        %760 = vmatprep.subr.bf16.mxu0 0
        %761 = vmatpush2.bf16.msra.mxu0 0
        %762 = vmatprep.subr.bf16.mxu0 0
        %763 = vmatpush2.bf16.msra.mxu0 0
        %764 = vmatprep.subr.bf16.mxu0 0
        %765 = vmatpush2.bf16.msra.mxu0 0
        %766 = vmatprep.subr.bf16.mxu0 0
        %767 = vmatpush2.bf16.msra.mxu0 0
        %768 = vmatprep.subr.bf16.mxu0 0
        %769 = vmatpush2.bf16.msra.mxu0 0
        %770 = vmatprep.subr.bf16.mxu0 0
        %771 = vmatpush2.bf16.msra.mxu0 0
        %772 = vmatprep.mubr.bf16.mxu0 0
        %773 = vmatmul.mubr.bf16.gmra.mxu0 %v668
        %v774 = vpop.f32.mrf.mxu0
        %v775 = vadd.f32 %v690, %v774
        %v776 = vpop.f32.mrf.mxu0
        %v777 = vpop.f32.mrf.mxu0
        %v778 = vpop.f32.mrf.mxu0
        %779 = vdwg.mxu0
        %780 = vst [vmem:[%s268] sm:$0xff] %v775
        %s781 = sand.u32 %s141, 1
        %s782 = scalar_lea.sflag [#allocation4], %s781
        %s783 = sand.u32 %s141, 1
        %s784 = smul.addr %s783, 8
        %s785 = scalar_lea.vmem [#allocation8], %s784
        // Predicated region
        $region53: #{tpu_custom_call.1} parent=39 // pred_check
          %p786 = pneg %p151
        $region54: #{tpu_custom_call.1} parent=39 // pred_check_branch
          %788 = sbr.rel (%p786) target = $region56
        $region55: #{tpu_custom_call.1} parent=39 // pred_region
          %s790 = ssub.s32 128, 128
          %791 = vsyncadd %s782, %s790
          %s792 = smul.addr %s23, 128
          %s793 = scalar_lea.hbm %s5, %s792
          %s795 = sshll.u32 %s785, 4
          %s796 = int_to_ptr.vmem [resolvable:$true] %s795
          %798 = dma.vmem_to_hbm [thread:$0]  %s796, 128, %s793, %s782
        $region56: #{tpu_custom_call.1} parent=39 // pred_fallthru
          _
      $region40: #{tpu_custom_call.1} parent=5 // pred_fallthru
        _
      %p799 = scmp.le.s32.totalorder 2, %s18
      // Predicated region
      $region57: #{tpu_custom_call.1} parent=5 // pred_check
        %p800 = pneg %p799
      $region58: #{tpu_custom_call.1} parent=5 // pred_check_branch
        %802 = sbr.rel (%p800) target = $region60
      $region59: #{tpu_custom_call.1} parent=5 // pred_region
        %s803 = ssub.s32 %s18, 2
        // Predicated region
        $region61: #{tpu_custom_call.1} parent=59 // pred_check
          %p804 = pneg %p157
        $region62: #{tpu_custom_call.1} parent=59 // pred_check_branch
          %806 = sbr.rel (%p804) target = $region64
        $region63: #{tpu_custom_call.1} parent=59 // pred_region
          %s807 = sand.u32 %s142, 1
          %s808 = scalar_lea.sflag [#allocation4], %s807
          %s809 = sand.u32 %s142, 1
          %s810 = smul.addr %s809, 8
          %s811 = scalar_lea.vmem [#allocation8], %s810
          %812 = dma.done %s808, 128
        $region64: #{tpu_custom_call.1} parent=59 // pred_fallthru
          _
      $region60: #{tpu_custom_call.1} parent=5 // pred_fallthru
        _
    $region6: #{tpu_custom_call.1} parent=1 // loop_footer
      %s22 = sadd.s32 1, %s18
    $region7: #{tpu_custom_call.1} parent=1 // loop_footer_branch
      %17 = sbr.rel target = $region3
    $region8: #{tpu_custom_call.1} parent=1 // loop_exit
      _
    %813 = vsyncpa [#allocation3], 1
    %s814 = scalar_lea.sflag [#allocation3], 1
    %815 = vsyncpa %s814, 1
    %816 = vsyncpa [#allocation6], 1
    %817 = vsyncpa [#allocation4], 1
    %s818 = scalar_lea.sflag [#allocation4], 1
    %819 = vsyncpa %s818, 1

// kernel: tpu_custom_call.1
$region0: #{tpu_custom_call.1}
  #allocation0 [shape = 'u32[]', space=smem, size = 0x4, offset = 0x4, fixed_abs, tag = 'smem constant byte address 0x4 - core index']
  #allocation1 [shape = 'u32[144,128]{1,0:T(1,128)}', space=vmem, size = 0x12000, scoped, tag = 'internal scratch']
  %s0 = inlined_call_operand.hbm [shape: bf16[2,8,128], index: 0, kind: input, shape index: {}]
  %s1 = inlined_call_operand.hbm [shape: bf16[128,384], index: 1, kind: input, shape index: {}]
  %s2 = inlined_call_operand.hbm [shape: bf16[128,128], index: 2, kind: input, shape index: {}]
  %s3 = inlined_call_operand.vmem [shape: f32[1,384], index: 3, kind: input, shape index: {}]
  %s4 = inlined_call_operand.vmem [shape: f32[1,128], index: 4, kind: input, shape index: {}]
  %s5 = inlined_call_operand.hbm [shape: f32[2,8,128], index: 5, kind: output, shape index: {}]
  %s6 = sld [smem:[#allocation0]]
  $region65: #{tpu_custom_call.1} parent=0
    _
  %s8 = ssub.s32 1, %s6
  %s9 = scalar_select 0, %s8, %s6
  $region1: #{tpu_custom_call.1} parent=0
    #allocation2 [shape = 'u8[4096]{0}', space=vmem, size = 0x1000, scoped, tag = 'input window, operand 0']
    #allocation3 [shape = 's32[2]{0}', space=sflag, size = 0x8, scoped, tag = 'scoped memory for tpu_custom_call.1']
    #allocation4 [shape = 's32[2]{0}', space=sflag, size = 0x8, scoped, tag = 'scoped memory for tpu_custom_call.1']
    #allocation5 [shape = 'u8[98304]{0}', space=vmem, size = 0x18000, scoped, tag = 'input window, operand 1, single buffered']
    #allocation6 [shape = 's32[1]{0}', space=sflag, size = 0x4, scoped, tag = 'scoped memory for tpu_custom_call.1']
    #allocation7 [shape = 'u8[32768]{0}', space=vmem, size = 0x8000, scoped, tag = 'input window, operand 2, single buffered']
    #allocation8 [shape = 'u8[8192]{0}', space=vmem, size = 0x2000, scoped, tag = 'output window, operand 0']
    %10 = vsyncpa [#allocation3], 0
    %s11 = scalar_lea.sflag [#allocation3], 1
    %12 = vsyncpa %s11, 0
    %13 = vsyncpa [#allocation6], 0
    %14 = vsyncpa [#allocation4], 0
    %s15 = scalar_lea.sflag [#allocation4], 1
    %16 = vsyncpa %s15, 0
    loop: start=0, step=1, limit=4
    $region2: #{tpu_custom_call.1} parent=1 // loop_pre_header
      _
    $region3: #{tpu_custom_call.1} parent=1 // loop_header
      %s18 = sphi 0, %s22
      %p19 = scmp.ge.s32.totalorder %s18, 4
      %s28 = sphi 0, %s30
      %s31 = sphi 0, %s28
      %s32 = sphi 0, %s31
      %s48 = sphi 0, %s32
      %s52 = sphi 0, %s52
      %s54 = sphi 0, %s52
      %s55 = sphi 0, %s54
      %s69 = sphi 0, %s55
      %s73 = sphi 0, %s73
      %s75 = sphi 0, %s73
      %s76 = sphi 0, %s75
      %s90 = sphi 0, %s76
      %s94 = sphi 0, %s94
      %s96 = sphi 0, %s94
      %s97 = sphi 0, %s96
      %s111 = sphi 0, %s97
      %s115 = sphi 0, %s115
      %s117 = sphi 0, %s115
      %s118 = sphi 0, %s117
      %s132 = sphi 0, %s118
      %s138 = sphi 0, %s140
      %s141 = sphi 0, %s138
      %s142 = sphi 0, %s141
      %s158 = sphi 0, %s142
    $region4: #{tpu_custom_call.1} parent=1 // loop_header_branch
      %21 = sbr.rel (%p19) target = $region8
    $region5: #{tpu_custom_call.1} parent=1 // loop_body
      %s23 = ssub.s32 %s18, 1
      %s24 = ssub.s32 %s18, 2
      %s25 = sadd.s32 %s18, 1
      %s26 = ssub.s32 %s18, %s25
      %p27 = scmp.eq.s32.totalorder %s26, 0
      %s29 = sadd.s32 %s28, 1
      %s30 = scalar_select %p27, %s28, %s29
      %p33 = pneg %p27
      %p34 = scmp.eq.s32.totalorder %s18, 1
      %p35 = por %p33, %p34
      %p36 = scmp.ne.s32.totalorder %s28, %s31
      %p37 = scmp.eq.s32.totalorder %s18, 0
      %p38 = por %p36, %p37
      %p39 = scmp.ne.s32.totalorder %s28, %s31
      %p40 = scmp.eq.s32.totalorder %s23, 1
      %p41 = por %p39, %p40
      %p42 = scmp.ne.s32.totalorder %s31, %s32
      %p43 = scmp.eq.s32.totalorder %s23, 0
      %p44 = por %p42, %p43
      %p45 = scmp.ne.s32.totalorder %s31, %s32
      %p46 = scmp.eq.s32.totalorder %s24, 1
      %p47 = por %p45, %p46
      %p49 = scmp.ne.s32.totalorder %s32, %s48
      %p50 = scmp.eq.s32.totalorder %s24, 0
      %p51 = por %p49, %p50
      %s53 = sadd.s32 %s52, 1
      %p56 = scmp.eq.s32.totalorder %s18, 1
      %p57 = scmp.ne.s32.totalorder %s52, %s54
      %p58 = scmp.eq.s32.totalorder %s18, 0
      %p59 = por %p57, %p58
      %p60 = scmp.ne.s32.totalorder %s52, %s54
      %p61 = scmp.eq.s32.totalorder %s23, 1
      %p62 = por %p60, %p61
      %p63 = scmp.ne.s32.totalorder %s54, %s55
      %p64 = scmp.eq.s32.totalorder %s23, 0
      %p65 = por %p63, %p64
      %p66 = scmp.ne.s32.totalorder %s54, %s55
      %p67 = scmp.eq.s32.totalorder %s24, 1
      %p68 = por %p66, %p67
      %p70 = scmp.ne.s32.totalorder %s55, %s69
      %p71 = scmp.eq.s32.totalorder %s24, 0
      %p72 = por %p70, %p71
      %s74 = sadd.s32 %s73, 1
      %p77 = scmp.eq.s32.totalorder %s18, 1
      %p78 = scmp.ne.s32.totalorder %s73, %s75
      %p79 = scmp.eq.s32.totalorder %s18, 0
      %p80 = por %p78, %p79
      %p81 = scmp.ne.s32.totalorder %s73, %s75
      %p82 = scmp.eq.s32.totalorder %s23, 1
      %p83 = por %p81, %p82
      %p84 = scmp.ne.s32.totalorder %s75, %s76
      %p85 = scmp.eq.s32.totalorder %s23, 0
      %p86 = por %p84, %p85
      %p87 = scmp.ne.s32.totalorder %s75, %s76
      %p88 = scmp.eq.s32.totalorder %s24, 1
      %p89 = por %p87, %p88
      %p91 = scmp.ne.s32.totalorder %s76, %s90
      %p92 = scmp.eq.s32.totalorder %s24, 0
      %p93 = por %p91, %p92
      %s95 = sadd.s32 %s94, 1
      %p98 = scmp.eq.s32.totalorder %s18, 1
      %p99 = scmp.ne.s32.totalorder %s94, %s96
      %p100 = scmp.eq.s32.totalorder %s18, 0
      %p101 = por %p99, %p100
      %p102 = scmp.ne.s32.totalorder %s94, %s96
      %p103 = scmp.eq.s32.totalorder %s23, 1
      %p104 = por %p102, %p103
      %p105 = scmp.ne.s32.totalorder %s96, %s97
      %p106 = scmp.eq.s32.totalorder %s23, 0
      %p107 = por %p105, %p106
      %p108 = scmp.ne.s32.totalorder %s96, %s97
      %p109 = scmp.eq.s32.totalorder %s24, 1
      %p110 = por %p108, %p109
      %p112 = scmp.ne.s32.totalorder %s97, %s111
      %p113 = scmp.eq.s32.totalorder %s24, 0
      %p114 = por %p112, %p113
      %s116 = sadd.s32 %s115, 1
      %p119 = scmp.eq.s32.totalorder %s18, 1
      %p120 = scmp.ne.s32.totalorder %s115, %s117
      %p121 = scmp.eq.s32.totalorder %s18, 0
      %p122 = por %p120, %p121
      %p123 = scmp.ne.s32.totalorder %s115, %s117
      %p124 = scmp.eq.s32.totalorder %s23, 1
      %p125 = por %p123, %p124
      %p126 = scmp.ne.s32.totalorder %s117, %s118
      %p127 = scmp.eq.s32.totalorder %s23, 0
      %p128 = por %p126, %p127
      %p129 = scmp.ne.s32.totalorder %s117, %s118
      %p130 = scmp.eq.s32.totalorder %s24, 1
      %p131 = por %p129, %p130
      %p133 = scmp.ne.s32.totalorder %s118, %s132
      %p134 = scmp.eq.s32.totalorder %s24, 0
      %p135 = por %p133, %p134
      %s136 = ssub.s32 %s18, %s25
      %p137 = scmp.eq.s32.totalorder %s136, 0
      %s139 = sadd.s32 %s138, 1
      %s140 = scalar_select %p137, %s138, %s139
      %p143 = pneg %p137
      %p144 = scmp.eq.s32.totalorder %s18, 1
      %p145 = por %p143, %p144
      %p146 = scmp.ne.s32.totalorder %s138, %s141
      %p147 = scmp.eq.s32.totalorder %s18, 0
      %p148 = por %p146, %p147
      %p149 = scmp.ne.s32.totalorder %s138, %s141
      %p150 = scmp.eq.s32.totalorder %s23, 1
      %p151 = por %p149, %p150
      %p152 = scmp.ne.s32.totalorder %s141, %s142
      %p153 = scmp.eq.s32.totalorder %s23, 0
      %p154 = por %p152, %p153
      %p155 = scmp.ne.s32.totalorder %s141, %s142
      %p156 = scmp.eq.s32.totalorder %s24, 1
      %p157 = por %p155, %p156
      %p159 = scmp.ne.s32.totalorder %s142, %s158
      %p160 = scmp.eq.s32.totalorder %s24, 0
      %p161 = por %p159, %p160
      %p162 = scmp.le.s32.totalorder 1, %s18
      %p163 = scmp.lt.s32.totalorder %s18, 3
      %p164 = pnand %p162, %p163
      %p165 = pneg %p164
      // Predicated region
      $region9: #{tpu_custom_call.1} parent=5 // pred_check
        _
      $region10: #{tpu_custom_call.1} parent=5 // pred_check_branch
        %167 = sbr.rel (%p164) target = $region12
      $region11: #{tpu_custom_call.1} parent=5 // pred_region
        %s168 = ssub.s32 %s18, 1
        // Predicated region
        $region13: #{tpu_custom_call.1} parent=11 // pred_check
          %p169 = pneg %p65
        $region14: #{tpu_custom_call.1} parent=11 // pred_check_branch
          %171 = sbr.rel (%p169) target = $region16
        $region15: #{tpu_custom_call.1} parent=11 // pred_region
          %s173 = ssub.s32 3072, 3072
          %174 = vsyncadd [#allocation6], %s173
          %s175 = sshll.u32 [#allocation5], 4
          %s176 = int_to_ptr.vmem [resolvable:$true] %s175
          %181 = dma.hbm_to_vmem [thread:$0]  %s1, 3072, %s176, [#allocation6], 192, 192, 12
        $region16: #{tpu_custom_call.1} parent=11 // pred_fallthru
          _
        // Predicated region
        $region17: #{tpu_custom_call.1} parent=11 // pred_check
          %p182 = pneg %p86
        $region18: #{tpu_custom_call.1} parent=11 // pred_check_branch
          %184 = sbr.rel (%p182) target = $region20
        $region19: #{tpu_custom_call.1} parent=11 // pred_region
          %s186 = ssub.s32 1024, 1024
          %187 = vsyncadd [#allocation6], %s186
          %s188 = sshll.u32 [#allocation7], 4
          %s189 = int_to_ptr.vmem [resolvable:$true] %s188
          %194 = dma.hbm_to_vmem [thread:$0]  %s2, 1024, %s189, [#allocation6], 64, 64, 4
        $region20: #{tpu_custom_call.1} parent=11 // pred_fallthru
          _
        // Predicated region
        $region21: #{tpu_custom_call.1} parent=11 // pred_check
          %p195 = pneg %p107
        $region22: #{tpu_custom_call.1} parent=11 // pred_check_branch
          %197 = sbr.rel (%p195) target = $region24
        $region23: #{tpu_custom_call.1} parent=11 // pred_region
          _
        $region24: #{tpu_custom_call.1} parent=11 // pred_fallthru
          _
        // Predicated region
        $region25: #{tpu_custom_call.1} parent=11 // pred_check
          %p198 = pneg %p128
        $region26: #{tpu_custom_call.1} parent=11 // pred_check_branch
          %200 = sbr.rel (%p198) target = $region28
        $region27: #{tpu_custom_call.1} parent=11 // pred_region
          _
        $region28: #{tpu_custom_call.1} parent=11 // pred_fallthru
          _
      $region12: #{tpu_custom_call.1} parent=5 // pred_fallthru
        _
      %p201 = scmp.lt.s32.totalorder %s18, 2
      // Predicated region
      $region29: #{tpu_custom_call.1} parent=5 // pred_check
        %p202 = pneg %p201
      $region30: #{tpu_custom_call.1} parent=5 // pred_check_branch
        %204 = sbr.rel (%p202) target = $region32
      $region31: #{tpu_custom_call.1} parent=5 // pred_region
        // Predicated region
        $region33: #{tpu_custom_call.1} parent=31 // pred_check
          %p205 = pneg %p38
        $region34: #{tpu_custom_call.1} parent=31 // pred_check_branch
          %207 = sbr.rel (%p205) target = $region36
        $region35: #{tpu_custom_call.1} parent=31 // pred_region
          %s208 = sand.u32 %s28, 1
          %s209 = scalar_lea.sflag [#allocation3], %s208
          %s210 = sand.u32 %s28, 1
          %s211 = smul.addr %s210, 4
          %s212 = scalar_lea.vmem [#allocation2], %s211
          %s214 = ssub.s32 64, 64
          %215 = vsyncadd %s209, %s214
          %s216 = smul.addr %s18, 64
          %s217 = scalar_lea.hbm %s0, %s216
          %s219 = sshll.u32 %s212, 4
          %s220 = int_to_ptr.vmem [resolvable:$true] %s219
          %222 = dma.hbm_to_vmem [thread:$0]  %s217, 64, %s220, %s209
        $region36: #{tpu_custom_call.1} parent=31 // pred_fallthru
          _
      $region32: #{tpu_custom_call.1} parent=5 // pred_fallthru
        _
      %p223 = scmp.le.s32.totalorder 1, %s18
      %p224 = scmp.lt.s32.totalorder %s18, 3
      %p225 = pnand %p223, %p224
      %p226 = pneg %p225
      // Predicated region
      $region37: #{tpu_custom_call.1} parent=5 // pred_check
        _
      $region38: #{tpu_custom_call.1} parent=5 // pred_check_branch
        %228 = sbr.rel (%p225) target = $region40
      $region39: #{tpu_custom_call.1} parent=5 // pred_region
        %s229 = ssub.s32 %s18, 1
        %s230 = sand.u32 %s31, 1
        %s231 = scalar_lea.sflag [#allocation3], %s230
        %s232 = sand.u32 %s31, 1
        %s233 = smul.addr %s232, 4
        %s234 = scalar_lea.vmem [#allocation2], %s233
        // Predicated region
        $region41: #{tpu_custom_call.1} parent=39 // pred_check
          %p235 = pneg %p44
        $region42: #{tpu_custom_call.1} parent=39 // pred_check_branch
          %237 = sbr.rel (%p235) target = $region44
        $region43: #{tpu_custom_call.1} parent=39 // pred_region
          %238 = dma.done %s231, 64
        $region44: #{tpu_custom_call.1} parent=39 // pred_fallthru
          _
        // Predicated region
        $region45: #{tpu_custom_call.1} parent=39 // pred_check
          %p239 = pneg %p65
        $region46: #{tpu_custom_call.1} parent=39 // pred_check_branch
          %241 = sbr.rel (%p239) target = $region48
        $region47: #{tpu_custom_call.1} parent=39 // pred_region
          %242 = dma.done [#allocation6], 3072
        $region48: #{tpu_custom_call.1} parent=39 // pred_fallthru
          _
        // Predicated region
        $region49: #{tpu_custom_call.1} parent=39 // pred_check
          %p243 = pneg %p86
        $region50: #{tpu_custom_call.1} parent=39 // pred_check_branch
          %245 = sbr.rel (%p243) target = $region52
        $region51: #{tpu_custom_call.1} parent=39 // pred_region
          %246 = dma.done [#allocation6], 1024
        $region52: #{tpu_custom_call.1} parent=39 // pred_fallthru
          _
        %s247 = sand.u32 %s31, 1
        %s248 = scalar_lea.sflag [#allocation3], %s247
        %s249 = sand.u32 %s31, 1
        %s250 = smul.addr %s249, 4
        %s251 = scalar_lea.vmem [#allocation2], %s250
        %p252 = pneg %p44
        %p253 = pneg %p41
        %p254 = pneg %p65
        %p255 = pneg %p62
        %p256 = pneg %p86
        %p257 = pneg %p83
        %p258 = pneg %p107
        %p259 = pneg %p104
        %p260 = pneg %p128
        %p261 = pneg %p125
        %p262 = pneg %p154
        %p263 = pneg %p151
        %s264 = sand.u32 %s141, 1
        %s265 = scalar_lea.sflag [#allocation4], %s264
        %s266 = sand.u32 %s141, 1
        %s267 = smul.addr %s266, 8
        %s268 = scalar_lea.vmem [#allocation8], %s267
        %v270 = vld [vmem:[%s234] sm:$0xf]
        %v271 = vld [vmem:[#allocation5] sm:$0xff]
        %v272 = vld [vmem:[#allocation5 + $0x8] sm:$0xf]
        %v273 = vld [vmem:[#allocation5 + $0xc] sm:$0xff]
        %v274 = vld [vmem:[#allocation5 + $0x14] sm:$0xf]
        %v275 = vld [vmem:[#allocation5 + $0x18] sm:$0xff]
        %v276 = vld [vmem:[#allocation5 + $0x20] sm:$0xf]
        %v277 = vld [vmem:[#allocation5 + $0x24] sm:$0xff]
        %v278 = vld [vmem:[#allocation5 + $0x2c] sm:$0xf]
        %v279 = vld [vmem:[#allocation5 + $0x30] sm:$0xff]
        %v280 = vld [vmem:[#allocation5 + $0x38] sm:$0xf]
        %v281 = vld [vmem:[#allocation5 + $0x3c] sm:$0xff]
        %v282 = vld [vmem:[#allocation5 + $0x44] sm:$0xf]
        %v283 = vld [vmem:[#allocation5 + $0x48] sm:$0xff]
        %v284 = vld [vmem:[#allocation5 + $0x50] sm:$0xf]
        %v285 = vld [vmem:[#allocation5 + $0x54] sm:$0xff]
        %v286 = vld [vmem:[#allocation5 + $0x5c] sm:$0xf]
        %v287 = vld [vmem:[#allocation5 + $0x60] sm:$0xff]
        %v288 = vld [vmem:[#allocation5 + $0x68] sm:$0xf]
        %v289 = vld [vmem:[#allocation5 + $0x6c] sm:$0xff]
        %v290 = vld [vmem:[#allocation5 + $0x74] sm:$0xf]
        %v291 = vld [vmem:[#allocation5 + $0x78] sm:$0xff]
        %v292 = vld [vmem:[#allocation5 + $0x80] sm:$0xf]
        %v293 = vld [vmem:[#allocation5 + $0x84] sm:$0xff]
        %v294 = vld [vmem:[#allocation5 + $0x8c] sm:$0xf]
        %v295 = vld [vmem:[#allocation5 + $0x90] sm:$0xff]
        %v296 = vld [vmem:[#allocation5 + $0x98] sm:$0xf]
        %v297 = vld [vmem:[#allocation5 + $0x9c] sm:$0xff]
        %v298 = vld [vmem:[#allocation5 + $0xa4] sm:$0xf]
        %v299 = vld [vmem:[#allocation5 + $0xa8] sm:$0xff]
        %v300 = vld [vmem:[#allocation5 + $0xb0] sm:$0xf]
        %v301 = vld [vmem:[#allocation5 + $0xb4] sm:$0xff]
        %v302 = vld [vmem:[#allocation5 + $0xbc] sm:$0xf]
        %v303 = vld [vmem:[%s3] sm:$0x7]
        %v305 = vlaneseq
        %v306 = vshrl.u32 %v305, 7
        %v307 = vsub.s32 0, %v306
        %v308 = vrot.slane %v303, %v307
        %v309 = vlaneseq
        %v310 = vshrl.u32 %v309, 7
        %v311 = vsub.s32 1, %v310
        %v312 = vrot.slane %v303, %v311
        %v313 = vlaneseq
        %v314 = vshrl.u32 %v313, 7
        %v315 = vsub.s32 2, %v314
        %v316 = vrot.slane %v303, %v315
        %v352 = vunpack.c.l.b16 %v271
        %v353 = vunpack.c.h.b16 %v271
        %v354 = vunpack.c.l.b16 %v272
        %v355 = vunpack.c.l.b16 %v273
        %v356 = vunpack.c.h.b16 %v273
        %v357 = vunpack.c.l.b16 %v274
        %v358 = vunpack.c.l.b16 %v275
        %v359 = vunpack.c.h.b16 %v275
        %v360 = vunpack.c.l.b16 %v276
        %v361 = vunpack.c.l.b16 %v277
        %v362 = vunpack.c.h.b16 %v277
        %v363 = vunpack.c.l.b16 %v278
        %v364 = vunpack.c.l.b16 %v279
        %v365 = vunpack.c.h.b16 %v279
        %v366 = vunpack.c.l.b16 %v280
        %v367 = vunpack.c.l.b16 %v281
        %v368 = vunpack.c.h.b16 %v281
        %v369 = vunpack.c.l.b16 %v282
        %v370 = vunpack.c.l.b16 %v283
        %v371 = vunpack.c.h.b16 %v283
        %v372 = vunpack.c.l.b16 %v284
        %v373 = vunpack.c.l.b16 %v285
        %v374 = vunpack.c.h.b16 %v285
        %v375 = vunpack.c.l.b16 %v286
        %v376 = vunpack.c.l.b16 %v287
        %v377 = vunpack.c.h.b16 %v287
        %v378 = vunpack.c.l.b16 %v288
        %v379 = vunpack.c.l.b16 %v289
        %v380 = vunpack.c.h.b16 %v289
        %v381 = vunpack.c.l.b16 %v290
        %v382 = vunpack.c.l.b16 %v291
        %v383 = vunpack.c.h.b16 %v291
        %v384 = vunpack.c.l.b16 %v292
        %v385 = vunpack.c.l.b16 %v293
        %v386 = vunpack.c.h.b16 %v293
        %v387 = vunpack.c.l.b16 %v294
        %v388 = vunpack.c.l.b16 %v295
        %v389 = vunpack.c.h.b16 %v295
        %v390 = vunpack.c.l.b16 %v296
        %v391 = vunpack.c.l.b16 %v297
        %v392 = vunpack.c.h.b16 %v297
        %v393 = vunpack.c.l.b16 %v298
        %v394 = vunpack.c.l.b16 %v299
        %v395 = vunpack.c.h.b16 %v299
        %v396 = vunpack.c.l.b16 %v300
        %v397 = vunpack.c.l.b16 %v301
        %v398 = vunpack.c.h.b16 %v301
        %v399 = vunpack.c.l.b16 %v302
        %v400 = vpack.c.b16 %v355, %v352
        %v401 = vpack.c.b16 %v356, %v353
        %v402 = vpack.c.b16 %v357, %v354
        %v403 = vpack.c.b16 %v361, %v358
        %v404 = vpack.c.b16 %v362, %v359
        %v405 = vpack.c.b16 %v363, %v360
        %v406 = vpack.c.b16 %v367, %v364
        %v407 = vpack.c.b16 %v368, %v365
        %v408 = vpack.c.b16 %v369, %v366
        %v409 = vpack.c.b16 %v373, %v370
        %v410 = vpack.c.b16 %v374, %v371
        %v411 = vpack.c.b16 %v375, %v372
        %v412 = vpack.c.b16 %v379, %v376
        %v413 = vpack.c.b16 %v380, %v377
        %v414 = vpack.c.b16 %v381, %v378
        %v415 = vpack.c.b16 %v385, %v382
        %v416 = vpack.c.b16 %v386, %v383
        %v417 = vpack.c.b16 %v387, %v384
        %v418 = vpack.c.b16 %v391, %v388
        %v419 = vpack.c.b16 %v392, %v389
        %v420 = vpack.c.b16 %v393, %v390
        %v421 = vpack.c.b16 %v397, %v394
        %v422 = vpack.c.b16 %v398, %v395
        %v423 = vpack.c.b16 %v399, %v396
        %448 = vmatprep.subr.bf16.mxu0 %v422
        %449 = vmatpush1.bf16.msra.mxu0 %v421
        %450 = vmatprep.subr.bf16.mxu0 %v419
        %451 = vmatpush1.bf16.msra.mxu0 %v418
        %452 = vmatprep.subr.bf16.mxu0 %v416
        %453 = vmatpush1.bf16.msra.mxu0 %v415
        %454 = vmatprep.subr.bf16.mxu0 %v413
        %455 = vmatpush1.bf16.msra.mxu0 %v412
        %456 = vmatprep.subr.bf16.mxu0 %v410
        %457 = vmatpush1.bf16.msra.mxu0 %v409
        %458 = vmatprep.subr.bf16.mxu0 %v407
        %459 = vmatpush1.bf16.msra.mxu0 %v406
        %460 = vmatprep.subr.bf16.mxu0 %v404
        %461 = vmatpush1.bf16.msra.mxu0 %v403
        %462 = vmatprep.subr.bf16.mxu0 %v401
        %463 = vmatpush1.bf16.msra.mxu0 %v400
        %464 = vmatprep.subr.bf16.mxu0 0
        %465 = vmatpush2.bf16.msra.mxu0 0
        %466 = vmatprep.subr.bf16.mxu0 0
        %467 = vmatpush2.bf16.msra.mxu0 0
        %468 = vmatprep.subr.bf16.mxu0 0
        %469 = vmatpush2.bf16.msra.mxu0 0
        %470 = vmatprep.subr.bf16.mxu0 0
        %471 = vmatpush2.bf16.msra.mxu0 0
        %472 = vmatprep.subr.bf16.mxu0 0
        %473 = vmatpush2.bf16.msra.mxu0 0
        %474 = vmatprep.subr.bf16.mxu0 0
        %475 = vmatpush2.bf16.msra.mxu0 0
        %476 = vmatprep.subr.bf16.mxu0 0
        %477 = vmatpush2.bf16.msra.mxu0 0
        %478 = vmatprep.subr.bf16.mxu0 0
        %479 = vmatpush2.bf16.msra.mxu0 0
        %480 = vmatprep.mubr.bf16.mxu0 0
        %481 = vmatmul.mubr.bf16.gmra.mxu0 %v270
        %v482 = vpop.f32.mrf.mxu0
        %v483 = vadd.f32 %v308, %v482
        %v484 = vpop.f32.mrf.mxu0
        %v485 = vadd.f32 %v312, %v484
        %v486 = vpop.f32.mrf.mxu0
        %v487 = vpop.f32.mrf.mxu0
        %488 = vdwg.mxu0
        %489 = vmatprep.subr.bf16.mxu0 0
        %490 = vmatpush1.bf16.msra.mxu0 %v423
        %491 = vmatprep.subr.bf16.mxu0 0
        %492 = vmatpush1.bf16.msra.mxu0 %v420
        %493 = vmatprep.subr.bf16.mxu0 0
        %494 = vmatpush1.bf16.msra.mxu0 %v417
        %495 = vmatprep.subr.bf16.mxu0 0
        %496 = vmatpush1.bf16.msra.mxu0 %v414
        %497 = vmatprep.subr.bf16.mxu0 0
        %498 = vmatpush1.bf16.msra.mxu0 %v411
        %499 = vmatprep.subr.bf16.mxu0 0
        %500 = vmatpush1.bf16.msra.mxu0 %v408
        %501 = vmatprep.subr.bf16.mxu0 0
        %502 = vmatpush1.bf16.msra.mxu0 %v405
        %503 = vmatprep.subr.bf16.mxu0 0
        %504 = vmatpush1.bf16.msra.mxu0 %v402
        %505 = vmatprep.subr.bf16.mxu0 0
        %506 = vmatpush2.bf16.msra.mxu0 0
        %507 = vmatprep.subr.bf16.mxu0 0
        %508 = vmatpush2.bf16.msra.mxu0 0
        %509 = vmatprep.subr.bf16.mxu0 0
        %510 = vmatpush2.bf16.msra.mxu0 0
        %511 = vmatprep.subr.bf16.mxu0 0
        %512 = vmatpush2.bf16.msra.mxu0 0
        %513 = vmatprep.subr.bf16.mxu0 0
        %514 = vmatpush2.bf16.msra.mxu0 0
        %515 = vmatprep.subr.bf16.mxu0 0
        %516 = vmatpush2.bf16.msra.mxu0 0
        %517 = vmatprep.subr.bf16.mxu0 0
        %518 = vmatpush2.bf16.msra.mxu0 0
        %519 = vmatprep.subr.bf16.mxu0 0
        %520 = vmatpush2.bf16.msra.mxu0 0
        %521 = vmatprep.mubr.bf16.mxu0 0
        %522 = vmatmul.mubr.bf16.gmra.mxu0 %v270
        %v523 = vpop.f32.mrf.mxu0
        %v524 = vadd.f32 %v316, %v523
        %v525 = vpop.f32.mrf.mxu0
        %v526 = vpop.f32.mrf.mxu0
        %v527 = vpop.f32.mrf.mxu0
        %528 = vdwg.mxu0
        %v529 = vpack.c.bf16 %v524, %v524
        %530 = vmatprep.subr.mxu0 0.0
        %531 = vmatpush1.xpose.msra.mxu0 0.0
        %532 = vmatprep.subr.mxu0 0.0
        %533 = vmatpush1.xpose.msra.mxu0 0.0
        %534 = vmatprep.subr.mxu0 0.0
        %535 = vmatpush1.xpose.msra.mxu0 0.0
        %536 = vmatprep.subr.mxu0 0.0
        %537 = vmatpush1.xpose.msra.mxu0 0.0
        %538 = vmatprep.subr.mxu0 0.0
        %539 = vmatpush1.xpose.msra.mxu0 0.0
        %540 = vmatprep.subr.mxu0 0.0
        %541 = vmatpush1.xpose.msra.mxu0 0.0
        %542 = vmatprep.subr.mxu0 0.0
        %543 = vmatpush1.xpose.msra.mxu0 0.0
        %544 = vmatprep.subr.mxu0 0.0
        %545 = vmatpush1.xpose.msra.mxu0 0.0
        %546 = vmatprep.subr.mxu0 0.0
        %547 = vmatpush1.xpose.msra.mxu0 0.0
        %548 = vmatprep.subr.mxu0 0.0
        %549 = vmatpush1.xpose.msra.mxu0 0.0
        %550 = vmatprep.subr.mxu0 0.0
        %551 = vmatpush1.xpose.msra.mxu0 0.0
        %552 = vmatprep.subr.mxu0 0.0
        %553 = vmatpush1.xpose.msra.mxu0 0.0
        %554 = vmatprep.subr.mxu0 0.0
        %555 = vmatpush1.xpose.msra.mxu0 0.0
        %556 = vmatprep.subr.mxu0 0.0
        %557 = vmatpush1.xpose.msra.mxu0 0.0
        %558 = vmatprep.subr.mxu0 0.0
        %559 = vmatpush1.xpose.msra.mxu0 0.0
        %560 = vmatprep.subr.mxu0 0.0
        %561 = vmatpush1.xpose.msra.mxu0 %v485
        %562 = vmatprep.subr.mxu0 0.0
        %563 = vmatpush2.xpose.msra.mxu0 0.0
        %564 = vmatprep.subr.mxu0 0.0
        %565 = vmatpush2.xpose.msra.mxu0 0.0
        %566 = vmatprep.subr.mxu0 0.0
        %567 = vmatpush2.xpose.msra.mxu0 0.0
        %568 = vmatprep.subr.mxu0 0.0
        %569 = vmatpush2.xpose.msra.mxu0 0.0
        %570 = vmatprep.subr.mxu0 0.0
        %571 = vmatpush2.xpose.msra.mxu0 0.0
        %572 = vmatprep.subr.mxu0 0.0
        %573 = vmatpush2.xpose.msra.mxu0 0.0
        %574 = vmatprep.subr.mxu0 0.0
        %575 = vmatpush2.xpose.msra.mxu0 0.0
        %576 = vmatprep.subr.mxu0 0.0
        %577 = vmatpush2.xpose.msra.mxu0 0.0
        %578 = vmatprep.subr.mxu0 0.0
        %579 = vmatpush2.xpose.msra.mxu0 0.0
        %580 = vmatprep.subr.mxu0 0.0
        %581 = vmatpush2.xpose.msra.mxu0 0.0
        %582 = vmatprep.subr.mxu0 0.0
        %583 = vmatpush2.xpose.msra.mxu0 0.0
        %584 = vmatprep.subr.mxu0 0.0
        %585 = vmatpush2.xpose.msra.mxu0 0.0
        %586 = vmatprep.subr.mxu0 0.0
        %587 = vmatpush2.xpose.msra.mxu0 0.0
        %588 = vmatprep.subr.mxu0 0.0
        %589 = vmatpush2.xpose.msra.mxu0 0.0
        %590 = vmatprep.subr.mxu0 0.0
        %591 = vmatpush2.xpose.msra.mxu0 0.0
        %592 = vmatprep.subr.mxu0 0.0
        %593 = vmatpush2.xpose.msra.mxu0 0.0
        %594 = vmatprep.mubr.f32.mxu0 0.0
        %595 = vmatmul.mubr.f32.gmra.mxu0 %v483
        %v596 = vpop.f32.mrf.mxu0
        %v597 = vadd.f32 0.0, %v596
        %v598 = vpop.f32.mrf.mxu0
        %599 = vdwg.mxu0
        %vm600 = vcmask 64512
        %v601 = vsel %vm600, %v597, -inf
        %v602 = vrot.slane %v601, 4
        %v603 = vmax.f32 %v601, %v602
        %v604 = vrot.slane %v603, 2
        %v605 = vmax.f32 %v603, %v604
        %v606 = vrot.slane %v605, 1
        %v607 = vmax.f32 %v605, %v606
        %v608 = vsub.f32 %v597, %v607
        %v609 = vmul.f32 %v608, 1.442695
        %v610 = vpow.pop %v609
        %v611 = vsel %vm600, %v610, 0.0
        %v612 = vrot.slane %v611, 4
        %v613 = vadd.f32 %v611, %v612
        %v614 = vrot.slane %v613, 2
        %v615 = vadd.f32 %v613, %v614
        %v616 = vrot.slane %v615, 1
        %v617 = vadd.f32 %v615, %v616
        %v618 = vrcp.pop %v617
        %v619 = vmul.f32 %v610, %v618
        %v620 = vpack.c.bf16 %v619, %v619
        %v622 = vsel %vm600, %v620, 0
        %vm624 = vcmask 1043456
        %v626 = vsel %vm624, %v529, 0
        %628 = vmatprep.subr.bf16.mxu0 0
        %629 = vmatpush1.bf16.msra.mxu0 0
        %630 = vmatprep.subr.bf16.mxu0 0
        %631 = vmatpush1.bf16.msra.mxu0 0
        %632 = vmatprep.subr.bf16.mxu0 0
        %633 = vmatpush1.bf16.msra.mxu0 0
        %634 = vmatprep.subr.bf16.mxu0 0
        %635 = vmatpush1.bf16.msra.mxu0 0
        %636 = vmatprep.subr.bf16.mxu0 0
        %637 = vmatpush1.bf16.msra.mxu0 0
        %638 = vmatprep.subr.bf16.mxu0 0
        %639 = vmatpush1.bf16.msra.mxu0 0
        %640 = vmatprep.subr.bf16.mxu0 0
        %641 = vmatpush1.bf16.msra.mxu0 0
        %642 = vmatprep.subr.bf16.mxu0 0
        %643 = vmatpush1.bf16.msra.mxu0 %v626
        %644 = vmatprep.subr.bf16.mxu0 0
        %645 = vmatpush2.bf16.msra.mxu0 0
        %646 = vmatprep.subr.bf16.mxu0 0
        %647 = vmatpush2.bf16.msra.mxu0 0
        %648 = vmatprep.subr.bf16.mxu0 0
        %649 = vmatpush2.bf16.msra.mxu0 0
        %650 = vmatprep.subr.bf16.mxu0 0
        %651 = vmatpush2.bf16.msra.mxu0 0
        %652 = vmatprep.subr.bf16.mxu0 0
        %653 = vmatpush2.bf16.msra.mxu0 0
        %654 = vmatprep.subr.bf16.mxu0 0
        %655 = vmatpush2.bf16.msra.mxu0 0
        %656 = vmatprep.subr.bf16.mxu0 0
        %657 = vmatpush2.bf16.msra.mxu0 0
        %658 = vmatprep.subr.bf16.mxu0 0
        %659 = vmatpush2.bf16.msra.mxu0 0
        %660 = vmatprep.mubr.bf16.mxu0 0
        %661 = vmatmul.mubr.bf16.gmra.mxu0 %v622
        %v662 = vpop.f32.mrf.mxu0
        %v663 = vadd.f32 0.0, %v662
        %v664 = vpop.f32.mrf.mxu0
        %v665 = vpop.f32.mrf.mxu0
        %v666 = vpop.f32.mrf.mxu0
        %667 = vdwg.mxu0
        %v668 = vpack.c.bf16 %v663, %v663
        %v669 = vld [vmem:[#allocation7] sm:$0xf]
        %v670 = vld [vmem:[#allocation7 + $0x4] sm:$0xf]
        %v671 = vld [vmem:[#allocation7 + $0x8] sm:$0xf]
        %v672 = vld [vmem:[#allocation7 + $0xc] sm:$0xf]
        %v673 = vld [vmem:[#allocation7 + $0x10] sm:$0xf]
        %v674 = vld [vmem:[#allocation7 + $0x14] sm:$0xf]
        %v675 = vld [vmem:[#allocation7 + $0x18] sm:$0xf]
        %v676 = vld [vmem:[#allocation7 + $0x1c] sm:$0xf]
        %v677 = vld [vmem:[#allocation7 + $0x20] sm:$0xf]
        %v678 = vld [vmem:[#allocation7 + $0x24] sm:$0xf]
        %v679 = vld [vmem:[#allocation7 + $0x28] sm:$0xf]
        %v680 = vld [vmem:[#allocation7 + $0x2c] sm:$0xf]
        %v681 = vld [vmem:[#allocation7 + $0x30] sm:$0xf]
        %v682 = vld [vmem:[#allocation7 + $0x34] sm:$0xf]
        %v683 = vld [vmem:[#allocation7 + $0x38] sm:$0xf]
        %v684 = vld [vmem:[#allocation7 + $0x3c] sm:$0xf]
        %v685 = vld [vmem:[%s4] sm:$0x1]
        %v687 = vlaneseq
        %v688 = vshrl.u32 %v687, 7
        %v689 = vsub.s32 0, %v688
        %v690 = vrot.slane %v685, %v689
        %v708 = vunpack.c.l.b16 %v669
        %v709 = vunpack.c.l.b16 %v670
        %v710 = vunpack.c.l.b16 %v671
        %v711 = vunpack.c.l.b16 %v672
        %v712 = vunpack.c.l.b16 %v673
        %v713 = vunpack.c.l.b16 %v674
        %v714 = vunpack.c.l.b16 %v675
        %v715 = vunpack.c.l.b16 %v676
        %v716 = vunpack.c.l.b16 %v677
        %v717 = vunpack.c.l.b16 %v678
        %v718 = vunpack.c.l.b16 %v679
        %v719 = vunpack.c.l.b16 %v680
        %v720 = vunpack.c.l.b16 %v681
        %v721 = vunpack.c.l.b16 %v682
        %v722 = vunpack.c.l.b16 %v683
        %v723 = vunpack.c.l.b16 %v684
        %v724 = vpack.c.b16 %v709, %v708
        %v725 = vpack.c.b16 %v711, %v710
        %v726 = vpack.c.b16 %v713, %v712
        %v727 = vpack.c.b16 %v715, %v714
        %v728 = vpack.c.b16 %v717, %v716
        %v729 = vpack.c.b16 %v719, %v718
        %v730 = vpack.c.b16 %v721, %v720
        %v731 = vpack.c.b16 %v723, %v722
        %740 = vmatprep.subr.bf16.mxu0 0
        %741 = vmatpush1.bf16.msra.mxu0 %v731
        %742 = vmatprep.subr.bf16.mxu0 0
        %743 = vmatpush1.bf16.msra.mxu0 %v730
        %744 = vmatprep.subr.bf16.mxu0 0
        %745 = vmatpush1.bf16.msra.mxu0 %v729
        %746 = vmatprep.subr.bf16.mxu0 0
        %747 = vmatpush1.bf16.msra.mxu0 %v728
        %748 = vmatprep.subr.bf16.mxu0 0
        %749 = vmatpush1.bf16.msra.mxu0 %v727
        %750 = vmatprep.subr.bf16.mxu0 0
        %751 = vmatpush1.bf16.msra.mxu0 %v726
        %752 = vmatprep.subr.bf16.mxu0 0
        %753 = vmatpush1.bf16.msra.mxu0 %v725
        %754 = vmatprep.subr.bf16.mxu0 0
        %755 = vmatpush1.bf16.msra.mxu0 %v724
        %756 = vmatprep.subr.bf16.mxu0 0
        %757 = vmatpush2.bf16.msra.mxu0 0
        %758 = vmatprep.subr.bf16.mxu0 0
        %759 = vmatpush2.bf16.msra.mxu0 0
        %760 = vmatprep.subr.bf16.mxu0 0
        %761 = vmatpush2.bf16.msra.mxu0 0
        %762 = vmatprep.subr.bf16.mxu0 0
        %763 = vmatpush2.bf16.msra.mxu0 0
        %764 = vmatprep.subr.bf16.mxu0 0
        %765 = vmatpush2.bf16.msra.mxu0 0
        %766 = vmatprep.subr.bf16.mxu0 0
        %767 = vmatpush2.bf16.msra.mxu0 0
        %768 = vmatprep.subr.bf16.mxu0 0
        %769 = vmatpush2.bf16.msra.mxu0 0
        %770 = vmatprep.subr.bf16.mxu0 0
        %771 = vmatpush2.bf16.msra.mxu0 0
        %772 = vmatprep.mubr.bf16.mxu0 0
        %773 = vmatmul.mubr.bf16.gmra.mxu0 %v668
        %v774 = vpop.f32.mrf.mxu0
        %v775 = vadd.f32 %v690, %v774
        %v776 = vpop.f32.mrf.mxu0
        %v777 = vpop.f32.mrf.mxu0
        %v778 = vpop.f32.mrf.mxu0
        %779 = vdwg.mxu0
        %780 = vst [vmem:[%s268] sm:$0xff] %v775
        %s781 = sand.u32 %s141, 1
        %s782 = scalar_lea.sflag [#allocation4], %s781
        %s783 = sand.u32 %s141, 1
        %s784 = smul.addr %s783, 8
        %s785 = scalar_lea.vmem [#allocation8], %s784
        // Predicated region
        $region53: #{tpu_custom_call.1} parent=39 // pred_check
          %p786 = pneg %p151
        $region54: #{tpu_custom_call.1} parent=39 // pred_check_branch
          %788 = sbr.rel (%p786) target = $region56
        $region55: #{tpu_custom_call.1} parent=39 // pred_region
          %s790 = ssub.s32 128, 128
          %791 = vsyncadd %s782, %s790
          %s792 = smul.addr %s23, 128
          %s793 = scalar_lea.hbm %s5, %s792
          %s795 = sshll.u32 %s785, 4
          %s796 = int_to_ptr.vmem [resolvable:$true] %s795
          %798 = dma.vmem_to_hbm [thread:$0]  %s796, 128, %s793, %s782
        $region56: #{tpu_custom_call.1} parent=39 // pred_fallthru
          _
      $region40: #{tpu_custom_call.1} parent=5 // pred_fallthru
        _
      %p799 = scmp.le.s32.totalorder 2, %s18
      // Predicated region
      $region57: #{tpu_custom_call.1} parent=5 // pred_check
        %p800 = pneg %p799
      $region58: #{tpu_custom_call.1} parent=5 // pred_check_branch
        %802 = sbr.rel (%p800) target = $region60
      $region59: #{tpu_custom_call.1} parent=5 // pred_region
        %s803 = ssub.s32 %s18, 2
        // Predicated region
        $region61: #{tpu_custom_call.1} parent=59 // pred_check
          %p804 = pneg %p157
        $region62: #{tpu_custom_call.1} parent=59 // pred_check_branch
          %806 = sbr.rel (%p804) target = $region64
        $region63: #{tpu_custom_call.1} parent=59 // pred_region
          %s807 = sand.u32 %s142, 1
          %s808 = scalar_lea.sflag [#allocation4], %s807
          %s809 = sand.u32 %s142, 1
          %s810 = smul.addr %s809, 8
          %s811 = scalar_lea.vmem [#allocation8], %s810
          %812 = dma.done %s808, 128
        $region64: #{tpu_custom_call.1} parent=59 // pred_fallthru
          _
      $region60: #{tpu_custom_call.1} parent=5 // pred_fallthru
        _
    $region6: #{tpu_custom_call.1} parent=1 // loop_footer
      %s22 = sadd.s32 1, %s18
    $region7: #{tpu_custom_call.1} parent=1 // loop_footer_branch
      %17 = sbr.rel target = $region3
    $region8: #{tpu_custom_call.1} parent=1 // loop_exit
      _
    %813 = vsyncpa [#allocation3], 1
    %s814 = scalar_lea.sflag [#allocation3], 1
    %815 = vsyncpa %s814, 1
    %816 = vsyncpa [#allocation6], 1
    %817 = vsyncpa [#allocation4], 1
    %s818 = scalar_lea.sflag [#allocation4], 1
    %819 = vsyncpa %s818, 1

</llo_original>
